<compile_context>
chip_gen: v5e
topology: v5e:2x2
jax: 0.10.0
libtpu: 0.0.40
codegen_flags: <defaults>
</compile_context>

<pallas_src>
import jax
import jax.numpy as jnp
from jax.experimental import pallas as pl
from jax.experimental.pallas import tpu as pltpu


def cnn_lstm_kernel(xim_ref, wconv_ref, bconv_ref, wih_ref, blstm_ref, whh_ref,
                    w1_ref, b1_ref, w2_ref, b2_ref, out_ref):
    TB = xim_ref.shape[0]
    H4 = whh_ref.shape[1]
    H = H4 // 4
    B = out_ref.shape[0]
    T = TB // B

    # --- Conv1d(k=3, pad=1) as one bf16 im2col matmul; bias + ReLU in f32.
    acc = jnp.dot(xim_ref[...], wconv_ref[...],
                  preferred_element_type=jnp.float32)          # (T*B, C) f32
    acc = jnp.maximum(acc + bconv_ref[...], 0.0)

    # --- Hoisted LSTM input projection for all time steps (BN fold and gate
    #     pre-scale already applied to wih/blstm in the wrapper).  Kept in
    #     vregs: (T*B, 4H) = (128, 128) f32, one (8,128) row-slice per step.
    zin = jnp.dot(acc.astype(jnp.bfloat16), wih_ref[...],
                  preferred_element_type=jnp.float32) + blstm_ref[...]

    # --- Per-lane affine that recovers sigmoid gates from a single tanh:
    #     i/f/o columns were pre-scaled by 0.5 -> sigmoid(x) = 0.5*tanh(x/2)+0.5
    #     g (cell-candidate) columns untouched -> tanh(x) = 1.0*tanh(x) + 0.0
    #     (hoisted out of the recurrence; computed once).
    lane = jax.lax.broadcasted_iota(jnp.int32, (1, H4), 1)
    is_g = jnp.logical_and(lane >= 2 * H, lane < 3 * H)
    gate_a = jnp.where(is_g, 1.0, 0.5).astype(jnp.float32)
    gate_b = jnp.where(is_g, 0.0, 0.5).astype(jnp.float32)

    # --- LSTM recurrence (single layer, batch_first); only h_T is needed.
    whh = whh_ref[...]                                          # (H, 4H) bf16
    h = jnp.zeros((B, H), jnp.float32)
    c = jnp.zeros((B, H), jnp.float32)
    for t in range(T):                                          # static unroll
        zin_t = zin[t * B:(t + 1) * B, :]                       # one (8,128) f32 vreg
        z = zin_t + jnp.dot(h.astype(jnp.bfloat16), whh,
                            preferred_element_type=jnp.float32)
        th = jnp.tanh(z)                                        # single full-vreg EUP op
        gates = gate_a * th + gate_b                            # exact sigmoid recovery
        i = gates[:, 0 * H:1 * H]
        f = gates[:, 1 * H:2 * H]
        g = gates[:, 2 * H:3 * H]
        o = gates[:, 3 * H:4 * H]
        c = f * c + i * g
        h = o * jnp.tanh(c)

    # --- FC head: Linear(H, 64) -> ReLU -> Linear(64, 1), output lane-padded.
    y = jnp.maximum(jnp.dot(h.astype(jnp.bfloat16), w1_ref[...],
                            preferred_element_type=jnp.float32) + b1_ref[...], 0.0)
    y = jnp.dot(y.astype(jnp.bfloat16), w2_ref[...],
                preferred_element_type=jnp.float32) + b2_ref[...]
    out_ref[...] = y.astype(out_ref.dtype)                      # (B, 128), col 0 real


def prepare_params(params, k_pad=32, out_pad=128):
    """One-time, weight-only preparation (hoisted out of the per-call path)."""
    eps = 1e-5
    F = params["w_conv"].shape[1]
    C = params["w_conv"].shape[2]
    H = params["w_hh"].shape[0]

    # Conv weight (K=3, F, C) -> (3F, C), zero-pad contraction rows to k_pad.
    w_conv_flat = params["w_conv"].reshape(3 * F, C)
    w_conv_flat = jnp.pad(w_conv_flat, ((0, k_pad - 3 * F), (0, 0)))

    # Fold BatchNorm1d (eval) into the LSTM input projection.
    bn_scale = (params["bn_gamma"] / jnp.sqrt(params["bn_var"] + eps)).reshape(C)
    bn_shift = params["bn_beta"].reshape(C) - params["bn_mean"].reshape(C) * bn_scale
    w_ih = bn_scale[:, None] * params["w_ih"]                           # (C, 4H)
    b_lstm = params["b_lstm"] + (bn_shift @ params["w_ih"])[None, :]    # (1, 4H)

    # Pre-scale the i/f/o gate columns by 0.5 (PyTorch gate order i, f, g, o)
    # so a single in-kernel tanh recovers sigmoid via 0.5*tanh(x/2)+0.5.
    gate_scale = jnp.concatenate([jnp.full((2 * H,), 0.5, jnp.float32),
                                  jnp.ones((H,), jnp.float32),
                                  jnp.full((H,), 0.5, jnp.float32)])
    w_ih = w_ih * gate_scale[None, :]
    w_hh = params["w_hh"] * gate_scale[None, :]
    b_lstm = b_lstm * gate_scale[None, :]

    # Lane-dense FC2: pad (64,1)/(1,1) to (64,out_pad)/(1,out_pad) with zeros.
    w_fc2 = jnp.zeros((params["w_fc2"].shape[0], out_pad), jnp.float32)
    w_fc2 = w_fc2.at[:, :1].set(params["w_fc2"])
    b_fc2 = jnp.zeros((1, out_pad), jnp.float32).at[:, :1].set(params["b_fc2"])

    return {
        "w_conv": w_conv_flat.astype(jnp.bfloat16),     # (k_pad, C) bf16
        "b_conv": params["b_conv"].astype(jnp.float32),  # (1, C)    f32
        "w_ih":   w_ih.astype(jnp.bfloat16),             # (C, 4H)   bf16
        "b_lstm": b_lstm.astype(jnp.float32),            # (1, 4H)   f32
        "w_hh":   w_hh.astype(jnp.bfloat16),              # (H, 4H)   bf16
        "w_fc1":  params["w_fc1"].astype(jnp.bfloat16),   # (H, 64)   bf16
        "b_fc1":  params["b_fc1"].astype(jnp.float32),    # (1, 64)   f32
        "w_fc2":  w_fc2.astype(jnp.bfloat16),             # (64, out_pad) bf16
        "b_fc2":  b_fc2,                                  # (1, out_pad)  f32
    }


@jax.jit
def cnn_lstm_forward(x, prep):
    """x: (B, T, F) float32 (same as the PyTorch module input, batch_first)."""
    B, T, F = x.shape
    k_pad = prep["w_conv"].shape[0]
    out_pad = prep["w_fc2"].shape[1]

    # ---- x-dependent glue only (layout): pad time, go time-major, im2col,
    #      zero-pad contraction dim to k_pad, cast MXU operand to bf16.
    xpad = jnp.pad(x.astype(jnp.float32), ((0, 0), (1, 1), (0, 0)))   # (B, T+2, F)
    xpad = jnp.transpose(xpad, (1, 0, 2))                             # (T+2, B, F)
    x_im2col = jnp.concatenate([xpad[0:T], xpad[1:T + 1], xpad[2:T + 2]],
                               axis=-1).reshape(T * B, 3 * F)         # (T*B, 3F)
    x_im2col = jnp.pad(x_im2col, ((0, 0), (0, k_pad - 3 * F)))
    x_im2col = x_im2col.astype(jnp.bfloat16)                          # (T*B, k_pad)

    args = (x_im2col, prep["w_conv"], prep["b_conv"], prep["w_ih"], prep["b_lstm"],
            prep["w_hh"], prep["w_fc1"], prep["b_fc1"], prep["w_fc2"], prep["b_fc2"])

    vmem = pl.BlockSpec(memory_space=pltpu.MemorySpace.VMEM)
    out = pl.pallas_call(
        cnn_lstm_kernel,
        out_shape=jax.ShapeDtypeStruct((B, out_pad), jnp.float32),
        in_specs=[vmem] * len(args),
        out_specs=vmem,
    )(*args)
    return out[:, :1]


def cnn_lstm_reference(x, params):
    """Pure-JAX f32 reference implementing the same math (correctness check)."""
    B, T, F = x.shape
    H = params["w_hh"].shape[0]
    eps = 1e-5

    xpad = jnp.pad(x, ((0, 0), (1, 1), (0, 0)))
    y = sum(jnp.einsum("btf,fc->btc", xpad[:, k:k + T, :], params["w_conv"][k])
            for k in range(3))
    y = y + params["b_conv"]
    y = jnp.maximum(y, 0.0)
    scale = params["bn_gamma"] / jnp.sqrt(params["bn_var"] + eps)
    shift = params["bn_beta"] - params["bn_mean"] * scale
    y = y * scale + shift

    h = jnp.zeros((B, H), jnp.float32)
    c = jnp.zeros((B, H), jnp.float32)
    for t in range(T):
        z = y[:, t, :] @ params["w_ih"] + h @ params["w_hh"] + params["b_lstm"]
        i = jax.nn.sigmoid(z[:, :H])
        f = jax.nn.sigmoid(z[:, H:2 * H])
        g = jnp.tanh(z[:, 2 * H:3 * H])
        o = jax.nn.sigmoid(z[:, 3 * H:])
        c = f * c + i * g
        h = o * jnp.tanh(c)

    out = jnp.maximum(h @ params["w_fc1"] + params["b_fc1"], 0.0)
    out = out @ params["w_fc2"] + params["b_fc2"]
    return out


if __name__ == "__main__":
    # batch=8, window_size=16, num_features=8, cnn_filters=32, lstm_units=32
    B, T, F, C, H = 8, 16, 8, 32, 32

    key = jax.random.PRNGKey(0)
    keys = jax.random.split(key, 12)
    params = {
        # Conv1d weight (C_out, C_in, K=3) stored as (K, C_in, C_out)
        "w_conv":  0.1 * jax.random.normal(keys[0], (3, F, C), jnp.float32),
        "b_conv":  0.1 * jax.random.normal(keys[1], (1, C), jnp.float32),
        "bn_gamma": 1.0 + 0.1 * jax.random.normal(keys[2], (1, C), jnp.float32),
        "bn_beta":  0.1 * jax.random.normal(keys[3], (1, C), jnp.float32),
        "bn_mean":  0.1 * jax.random.normal(keys[4], (1, C), jnp.float32),
        "bn_var":   jnp.abs(1.0 + 0.1 * jax.random.normal(keys[5], (1, C), jnp.float32)),
        # LSTM weights (PyTorch (4H, in)/(4H, H) transposed; b_ih + b_hh combined)
        "w_ih":    0.1 * jax.random.normal(keys[6], (C, 4 * H), jnp.float32),
        "w_hh":    0.1 * jax.random.normal(keys[7], (H, 4 * H), jnp.float32),
        "b_lstm":  0.1 * jax.random.normal(keys[8], (1, 4 * H), jnp.float32),
        # FC head
        "w_fc1":   0.1 * jax.random.normal(keys[9], (H, 64), jnp.float32),
        "b_fc1":   0.1 * jax.random.normal(keys[10], (1, 64), jnp.float32),
        "w_fc2":   0.1 * jax.random.normal(keys[11], (64, 1), jnp.float32),
        "b_fc2":   jnp.zeros((1, 1), jnp.float32),
    }

    x = jax.random.normal(jax.random.PRNGKey(1), (B, T, F), jnp.float32)

    # One-time, weight-only prep (hoisted out of the per-call path).
    prep = jax.tree_util.tree_map(jax.block_until_ready, prepare_params(params))

    out = jax.block_until_ready(cnn_lstm_forward(x, prep))
    ref = jax.block_until_ready(cnn_lstm_reference(x, params))

    assert out.shape == (B, 1), out.shape
    assert jnp.allclose(out, ref, rtol=5e-3, atol=5e-3)
    print("KERNEL_OK")
</pallas_src>

<mosaic_0001>
module attributes {stable_mosaic.version = 11 : i64} {
  func.func @cnn_lstm_kernel(%arg0: memref<128x32xbf16, #tpu.memory_space<vmem>>, %arg1: memref<32x32xbf16, #tpu.memory_space<vmem>>, %arg2: memref<1x32xf32, #tpu.memory_space<vmem>>, %arg3: memref<32x128xbf16, #tpu.memory_space<vmem>>, %arg4: memref<1x128xf32, #tpu.memory_space<vmem>>, %arg5: memref<32x128xbf16, #tpu.memory_space<vmem>>, %arg6: memref<32x64xbf16, #tpu.memory_space<vmem>>, %arg7: memref<1x64xf32, #tpu.memory_space<vmem>>, %arg8: memref<64x128xbf16, #tpu.memory_space<vmem>>, %arg9: memref<1x128xf32, #tpu.memory_space<vmem>>, %arg10: memref<8x128xf32, #tpu.memory_space<vmem>>) attributes {dimension_semantics = [], scalar_prefetch = 0 : i64, scratch_operands = 0 : i64, tpu.core_type = #tpu.core_type<tc>} {
    %c0 = arith.constant 0 : index
    %c0_0 = arith.constant 0 : index
    %0 = vector.load %arg0[%c0, %c0_0] : memref<128x32xbf16, #tpu.memory_space<vmem>>, vector<128x32xbf16>
    %c0_1 = arith.constant 0 : index
    %c0_2 = arith.constant 0 : index
    %1 = vector.load %arg1[%c0_1, %c0_2] : memref<32x32xbf16, #tpu.memory_space<vmem>>, vector<32x32xbf16>
    %cst = arith.constant dense<0.000000e+00> : vector<128x32xf32>
    %2 = tpu.matmul %0, %1, %cst {dimension_numbers = #tpu.dot_dimension_numbers<[1], [0], [0], [1], [0, 0, 1, 1], [], []>} : vector<128x32xbf16>, vector<32x32xbf16>, vector<128x32xf32> -> vector<128x32xf32>
    %c0_3 = arith.constant 0 : index
    %c0_4 = arith.constant 0 : index
    %3 = vector.load %arg2[%c0_3, %c0_4] : memref<1x32xf32, #tpu.memory_space<vmem>>, vector<1x32xf32>
    %4 = vector.broadcast %3 : vector<1x32xf32> to vector<128x32xf32>
    %5 = arith.addf %2, %4 : vector<128x32xf32>
    %cst_5 = arith.constant 0.000000e+00 : f32
    %6 = vector.broadcast %cst_5 : f32 to vector<128x32xf32>
    %7 = arith.maximumf %5, %6 : vector<128x32xf32>
    %8 = arith.truncf %7 : vector<128x32xf32> to vector<128x32xbf16>
    %c0_6 = arith.constant 0 : index
    %c0_7 = arith.constant 0 : index
    %9 = vector.load %arg3[%c0_6, %c0_7] : memref<32x128xbf16, #tpu.memory_space<vmem>>, vector<32x128xbf16>
    %cst_8 = arith.constant dense<0.000000e+00> : vector<128x128xf32>
    %10 = tpu.matmul %8, %9, %cst_8 {dimension_numbers = #tpu.dot_dimension_numbers<[1], [0], [0], [1], [0, 0, 1, 1], [], []>} : vector<128x32xbf16>, vector<32x128xbf16>, vector<128x128xf32> -> vector<128x128xf32>
    %c0_9 = arith.constant 0 : index
    %c0_10 = arith.constant 0 : index
    %11 = vector.load %arg4[%c0_9, %c0_10] : memref<1x128xf32, #tpu.memory_space<vmem>>, vector<1x128xf32>
    %12 = vector.broadcast %11 : vector<1x128xf32> to vector<128x128xf32>
    %13 = arith.addf %10, %12 : vector<128x128xf32>
    %14 = tpu.iota {dimensions = array<i32: 1>} : vector<1x128xi32>
    %c64_i32 = arith.constant 64 : i32
    %15 = vector.broadcast %c64_i32 : i32 to vector<1x128xi32>
    %16 = arith.cmpi sge, %14, %15 : vector<1x128xi32>
    %c96_i32 = arith.constant 96 : i32
    %17 = vector.broadcast %c96_i32 : i32 to vector<1x128xi32>
    %18 = arith.cmpi slt, %14, %17 : vector<1x128xi32>
    %19 = arith.andi %16, %18 : vector<1x128xi1>
    %cst_11 = arith.constant 1.000000e+00 : f32
    %cst_12 = arith.constant 5.000000e-01 : f32
    %20 = vector.broadcast %cst_11 : f32 to vector<1x128xf32>
    %21 = vector.broadcast %cst_12 : f32 to vector<1x128xf32>
    %22 = arith.select %19, %20, %21 : vector<1x128xi1>, vector<1x128xf32>
    %cst_13 = arith.constant 0.000000e+00 : f32
    %cst_14 = arith.constant 5.000000e-01 : f32
    %23 = vector.broadcast %cst_13 : f32 to vector<1x128xf32>
    %24 = vector.broadcast %cst_14 : f32 to vector<1x128xf32>
    %25 = arith.select %19, %23, %24 : vector<1x128xi1>, vector<1x128xf32>
    %c0_15 = arith.constant 0 : index
    %c0_16 = arith.constant 0 : index
    %26 = vector.load %arg5[%c0_15, %c0_16] : memref<32x128xbf16, #tpu.memory_space<vmem>>, vector<32x128xbf16>
    %cst_17 = arith.constant 0.000000e+00 : f32
    %27 = vector.broadcast %cst_17 : f32 to vector<8x32xf32>
    %cst_18 = arith.constant 0.000000e+00 : f32
    %28 = vector.broadcast %cst_18 : f32 to vector<8x32xf32>
    %29 = vector.extract_strided_slice %13 {offsets = [0, 0], sizes = [8, 128], strides = [1, 1]} : vector<128x128xf32> to vector<8x128xf32>
    %30 = arith.truncf %27 : vector<8x32xf32> to vector<8x32xbf16>
    %cst_19 = arith.constant dense<0.000000e+00> : vector<8x128xf32>
    %31 = tpu.matmul %30, %26, %cst_19 {dimension_numbers = #tpu.dot_dimension_numbers<[1], [0], [0], [1], [0, 0, 1, 1], [], []>} : vector<8x32xbf16>, vector<32x128xbf16>, vector<8x128xf32> -> vector<8x128xf32>
    %32 = arith.addf %29, %31 : vector<8x128xf32>
    %33 = math.tanh %32 : vector<8x128xf32>
    %34 = vector.broadcast %22 : vector<1x128xf32> to vector<8x128xf32>
    %35 = arith.mulf %34, %33 : vector<8x128xf32>
    %36 = vector.broadcast %25 : vector<1x128xf32> to vector<8x128xf32>
    %37 = arith.addf %35, %36 : vector<8x128xf32>
    %38 = vector.extract_strided_slice %37 {offsets = [0, 0], sizes = [8, 32], strides = [1, 1]} : vector<8x128xf32> to vector<8x32xf32>
    %39 = vector.extract_strided_slice %37 {offsets = [0, 32], sizes = [8, 32], strides = [1, 1]} : vector<8x128xf32> to vector<8x32xf32>
    %40 = vector.extract_strided_slice %37 {offsets = [0, 64], sizes = [8, 32], strides = [1, 1]} : vector<8x128xf32> to vector<8x32xf32>
    %41 = vector.extract_strided_slice %37 {offsets = [0, 96], sizes = [8, 32], strides = [1, 1]} : vector<8x128xf32> to vector<8x32xf32>
    %42 = arith.mulf %39, %28 : vector<8x32xf32>
    %43 = arith.mulf %38, %40 : vector<8x32xf32>
    %44 = arith.addf %42, %43 : vector<8x32xf32>
    %45 = math.tanh %44 : vector<8x32xf32>
    %46 = arith.mulf %41, %45 : vector<8x32xf32>
    %47 = vector.extract_strided_slice %13 {offsets = [8, 0], sizes = [8, 128], strides = [1, 1]} : vector<128x128xf32> to vector<8x128xf32>
    %48 = arith.truncf %46 : vector<8x32xf32> to vector<8x32xbf16>
    %cst_20 = arith.constant dense<0.000000e+00> : vector<8x128xf32>
    %49 = tpu.matmul %48, %26, %cst_20 {dimension_numbers = #tpu.dot_dimension_numbers<[1], [0], [0], [1], [0, 0, 1, 1], [], []>} : vector<8x32xbf16>, vector<32x128xbf16>, vector<8x128xf32> -> vector<8x128xf32>
    %50 = arith.addf %47, %49 : vector<8x128xf32>
    %51 = math.tanh %50 : vector<8x128xf32>
    %52 = vector.broadcast %22 : vector<1x128xf32> to vector<8x128xf32>
    %53 = arith.mulf %52, %51 : vector<8x128xf32>
    %54 = vector.broadcast %25 : vector<1x128xf32> to vector<8x128xf32>
    %55 = arith.addf %53, %54 : vector<8x128xf32>
    %56 = vector.extract_strided_slice %55 {offsets = [0, 0], sizes = [8, 32], strides = [1, 1]} : vector<8x128xf32> to vector<8x32xf32>
    %57 = vector.extract_strided_slice %55 {offsets = [0, 32], sizes = [8, 32], strides = [1, 1]} : vector<8x128xf32> to vector<8x32xf32>
    %58 = vector.extract_strided_slice %55 {offsets = [0, 64], sizes = [8, 32], strides = [1, 1]} : vector<8x128xf32> to vector<8x32xf32>
    %59 = vector.extract_strided_slice %55 {offsets = [0, 96], sizes = [8, 32], strides = [1, 1]} : vector<8x128xf32> to vector<8x32xf32>
    %60 = arith.mulf %57, %44 : vector<8x32xf32>
    %61 = arith.mulf %56, %58 : vector<8x32xf32>
    %62 = arith.addf %60, %61 : vector<8x32xf32>
    %63 = math.tanh %62 : vector<8x32xf32>
    %64 = arith.mulf %59, %63 : vector<8x32xf32>
    %65 = vector.extract_strided_slice %13 {offsets = [16, 0], sizes = [8, 128], strides = [1, 1]} : vector<128x128xf32> to vector<8x128xf32>
    %66 = arith.truncf %64 : vector<8x32xf32> to vector<8x32xbf16>
    %cst_21 = arith.constant dense<0.000000e+00> : vector<8x128xf32>
    %67 = tpu.matmul %66, %26, %cst_21 {dimension_numbers = #tpu.dot_dimension_numbers<[1], [0], [0], [1], [0, 0, 1, 1], [], []>} : vector<8x32xbf16>, vector<32x128xbf16>, vector<8x128xf32> -> vector<8x128xf32>
    %68 = arith.addf %65, %67 : vector<8x128xf32>
    %69 = math.tanh %68 : vector<8x128xf32>
    %70 = vector.broadcast %22 : vector<1x128xf32> to vector<8x128xf32>
    %71 = arith.mulf %70, %69 : vector<8x128xf32>
    %72 = vector.broadcast %25 : vector<1x128xf32> to vector<8x128xf32>
    %73 = arith.addf %71, %72 : vector<8x128xf32>
    %74 = vector.extract_strided_slice %73 {offsets = [0, 0], sizes = [8, 32], strides = [1, 1]} : vector<8x128xf32> to vector<8x32xf32>
    %75 = vector.extract_strided_slice %73 {offsets = [0, 32], sizes = [8, 32], strides = [1, 1]} : vector<8x128xf32> to vector<8x32xf32>
    %76 = vector.extract_strided_slice %73 {offsets = [0, 64], sizes = [8, 32], strides = [1, 1]} : vector<8x128xf32> to vector<8x32xf32>
    %77 = vector.extract_strided_slice %73 {offsets = [0, 96], sizes = [8, 32], strides = [1, 1]} : vector<8x128xf32> to vector<8x32xf32>
    %78 = arith.mulf %75, %62 : vector<8x32xf32>
    %79 = arith.mulf %74, %76 : vector<8x32xf32>
    %80 = arith.addf %78, %79 : vector<8x32xf32>
    %81 = math.tanh %80 : vector<8x32xf32>
    %82 = arith.mulf %77, %81 : vector<8x32xf32>
    %83 = vector.extract_strided_slice %13 {offsets = [24, 0], sizes = [8, 128], strides = [1, 1]} : vector<128x128xf32> to vector<8x128xf32>
    %84 = arith.truncf %82 : vector<8x32xf32> to vector<8x32xbf16>
    %cst_22 = arith.constant dense<0.000000e+00> : vector<8x128xf32>
    %85 = tpu.matmul %84, %26, %cst_22 {dimension_numbers = #tpu.dot_dimension_numbers<[1], [0], [0], [1], [0, 0, 1, 1], [], []>} : vector<8x32xbf16>, vector<32x128xbf16>, vector<8x128xf32> -> vector<8x128xf32>
    %86 = arith.addf %83, %85 : vector<8x128xf32>
    %87 = math.tanh %86 : vector<8x128xf32>
    %88 = vector.broadcast %22 : vector<1x128xf32> to vector<8x128xf32>
    %89 = arith.mulf %88, %87 : vector<8x128xf32>
    %90 = vector.broadcast %25 : vector<1x128xf32> to vector<8x128xf32>
    %91 = arith.addf %89, %90 : vector<8x128xf32>
    %92 = vector.extract_strided_slice %91 {offsets = [0, 0], sizes = [8, 32], strides = [1, 1]} : vector<8x128xf32> to vector<8x32xf32>
    %93 = vector.extract_strided_slice %91 {offsets = [0, 32], sizes = [8, 32], strides = [1, 1]} : vector<8x128xf32> to vector<8x32xf32>
    %94 = vector.extract_strided_slice %91 {offsets = [0, 64], sizes = [8, 32], strides = [1, 1]} : vector<8x128xf32> to vector<8x32xf32>
    %95 = vector.extract_strided_slice %91 {offsets = [0, 96], sizes = [8, 32], strides = [1, 1]} : vector<8x128xf32> to vector<8x32xf32>
    %96 = arith.mulf %93, %80 : vector<8x32xf32>
    %97 = arith.mulf %92, %94 : vector<8x32xf32>
    %98 = arith.addf %96, %97 : vector<8x32xf32>
    %99 = math.tanh %98 : vector<8x32xf32>
    %100 = arith.mulf %95, %99 : vector<8x32xf32>
    %101 = vector.extract_strided_slice %13 {offsets = [32, 0], sizes = [8, 128], strides = [1, 1]} : vector<128x128xf32> to vector<8x128xf32>
    %102 = arith.truncf %100 : vector<8x32xf32> to vector<8x32xbf16>
    %cst_23 = arith.constant dense<0.000000e+00> : vector<8x128xf32>
    %103 = tpu.matmul %102, %26, %cst_23 {dimension_numbers = #tpu.dot_dimension_numbers<[1], [0], [0], [1], [0, 0, 1, 1], [], []>} : vector<8x32xbf16>, vector<32x128xbf16>, vector<8x128xf32> -> vector<8x128xf32>
    %104 = arith.addf %101, %103 : vector<8x128xf32>
    %105 = math.tanh %104 : vector<8x128xf32>
    %106 = vector.broadcast %22 : vector<1x128xf32> to vector<8x128xf32>
    %107 = arith.mulf %106, %105 : vector<8x128xf32>
    %108 = vector.broadcast %25 : vector<1x128xf32> to vector<8x128xf32>
    %109 = arith.addf %107, %108 : vector<8x128xf32>
    %110 = vector.extract_strided_slice %109 {offsets = [0, 0], sizes = [8, 32], strides = [1, 1]} : vector<8x128xf32> to vector<8x32xf32>
    %111 = vector.extract_strided_slice %109 {offsets = [0, 32], sizes = [8, 32], strides = [1, 1]} : vector<8x128xf32> to vector<8x32xf32>
    %112 = vector.extract_strided_slice %109 {offsets = [0, 64], sizes = [8, 32], strides = [1, 1]} : vector<8x128xf32> to vector<8x32xf32>
    %113 = vector.extract_strided_slice %109 {offsets = [0, 96], sizes = [8, 32], strides = [1, 1]} : vector<8x128xf32> to vector<8x32xf32>
    %114 = arith.mulf %111, %98 : vector<8x32xf32>
    %115 = arith.mulf %110, %112 : vector<8x32xf32>
    %116 = arith.addf %114, %115 : vector<8x32xf32>
    %117 = math.tanh %116 : vector<8x32xf32>
    %118 = arith.mulf %113, %117 : vector<8x32xf32>
    %119 = vector.extract_strided_slice %13 {offsets = [40, 0], sizes = [8, 128], strides = [1, 1]} : vector<128x128xf32> to vector<8x128xf32>
    %120 = arith.truncf %118 : vector<8x32xf32> to vector<8x32xbf16>
    %cst_24 = arith.constant dense<0.000000e+00> : vector<8x128xf32>
    %121 = tpu.matmul %120, %26, %cst_24 {dimension_numbers = #tpu.dot_dimension_numbers<[1], [0], [0], [1], [0, 0, 1, 1], [], []>} : vector<8x32xbf16>, vector<32x128xbf16>, vector<8x128xf32> -> vector<8x128xf32>
    %122 = arith.addf %119, %121 : vector<8x128xf32>
    %123 = math.tanh %122 : vector<8x128xf32>
    %124 = vector.broadcast %22 : vector<1x128xf32> to vector<8x128xf32>
    %125 = arith.mulf %124, %123 : vector<8x128xf32>
    %126 = vector.broadcast %25 : vector<1x128xf32> to vector<8x128xf32>
    %127 = arith.addf %125, %126 : vector<8x128xf32>
    %128 = vector.extract_strided_slice %127 {offsets = [0, 0], sizes = [8, 32], strides = [1, 1]} : vector<8x128xf32> to vector<8x32xf32>
    %129 = vector.extract_strided_slice %127 {offsets = [0, 32], sizes = [8, 32], strides = [1, 1]} : vector<8x128xf32> to vector<8x32xf32>
    %130 = vector.extract_strided_slice %127 {offsets = [0, 64], sizes = [8, 32], strides = [1, 1]} : vector<8x128xf32> to vector<8x32xf32>
    %131 = vector.extract_strided_slice %127 {offsets = [0, 96], sizes = [8, 32], strides = [1, 1]} : vector<8x128xf32> to vector<8x32xf32>
    %132 = arith.mulf %129, %116 : vector<8x32xf32>
    %133 = arith.mulf %128, %130 : vector<8x32xf32>
    %134 = arith.addf %132, %133 : vector<8x32xf32>
    %135 = math.tanh %134 : vector<8x32xf32>
    %136 = arith.mulf %131, %135 : vector<8x32xf32>
    %137 = vector.extract_strided_slice %13 {offsets = [48, 0], sizes = [8, 128], strides = [1, 1]} : vector<128x128xf32> to vector<8x128xf32>
    %138 = arith.truncf %136 : vector<8x32xf32> to vector<8x32xbf16>
    %cst_25 = arith.constant dense<0.000000e+00> : vector<8x128xf32>
    %139 = tpu.matmul %138, %26, %cst_25 {dimension_numbers = #tpu.dot_dimension_numbers<[1], [0], [0], [1], [0, 0, 1, 1], [], []>} : vector<8x32xbf16>, vector<32x128xbf16>, vector<8x128xf32> -> vector<8x128xf32>
    %140 = arith.addf %137, %139 : vector<8x128xf32>
    %141 = math.tanh %140 : vector<8x128xf32>
    %142 = vector.broadcast %22 : vector<1x128xf32> to vector<8x128xf32>
    %143 = arith.mulf %142, %141 : vector<8x128xf32>
    %144 = vector.broadcast %25 : vector<1x128xf32> to vector<8x128xf32>
    %145 = arith.addf %143, %144 : vector<8x128xf32>
    %146 = vector.extract_strided_slice %145 {offsets = [0, 0], sizes = [8, 32], strides = [1, 1]} : vector<8x128xf32> to vector<8x32xf32>
    %147 = vector.extract_strided_slice %145 {offsets = [0, 32], sizes = [8, 32], strides = [1, 1]} : vector<8x128xf32> to vector<8x32xf32>
    %148 = vector.extract_strided_slice %145 {offsets = [0, 64], sizes = [8, 32], strides = [1, 1]} : vector<8x128xf32> to vector<8x32xf32>
    %149 = vector.extract_strided_slice %145 {offsets = [0, 96], sizes = [8, 32], strides = [1, 1]} : vector<8x128xf32> to vector<8x32xf32>
    %150 = arith.mulf %147, %134 : vector<8x32xf32>
    %151 = arith.mulf %146, %148 : vector<8x32xf32>
    %152 = arith.addf %150, %151 : vector<8x32xf32>
    %153 = math.tanh %152 : vector<8x32xf32>
    %154 = arith.mulf %149, %153 : vector<8x32xf32>
    %155 = vector.extract_strided_slice %13 {offsets = [56, 0], sizes = [8, 128], strides = [1, 1]} : vector<128x128xf32> to vector<8x128xf32>
    %156 = arith.truncf %154 : vector<8x32xf32> to vector<8x32xbf16>
    %cst_26 = arith.constant dense<0.000000e+00> : vector<8x128xf32>
    %157 = tpu.matmul %156, %26, %cst_26 {dimension_numbers = #tpu.dot_dimension_numbers<[1], [0], [0], [1], [0, 0, 1, 1], [], []>} : vector<8x32xbf16>, vector<32x128xbf16>, vector<8x128xf32> -> vector<8x128xf32>
    %158 = arith.addf %155, %157 : vector<8x128xf32>
    %159 = math.tanh %158 : vector<8x128xf32>
    %160 = vector.broadcast %22 : vector<1x128xf32> to vector<8x128xf32>
    %161 = arith.mulf %160, %159 : vector<8x128xf32>
    %162 = vector.broadcast %25 : vector<1x128xf32> to vector<8x128xf32>
    %163 = arith.addf %161, %162 : vector<8x128xf32>
    %164 = vector.extract_strided_slice %163 {offsets = [0, 0], sizes = [8, 32], strides = [1, 1]} : vector<8x128xf32> to vector<8x32xf32>
    %165 = vector.extract_strided_slice %163 {offsets = [0, 32], sizes = [8, 32], strides = [1, 1]} : vector<8x128xf32> to vector<8x32xf32>
    %166 = vector.extract_strided_slice %163 {offsets = [0, 64], sizes = [8, 32], strides = [1, 1]} : vector<8x128xf32> to vector<8x32xf32>
    %167 = vector.extract_strided_slice %163 {offsets = [0, 96], sizes = [8, 32], strides = [1, 1]} : vector<8x128xf32> to vector<8x32xf32>
    %168 = arith.mulf %165, %152 : vector<8x32xf32>
    %169 = arith.mulf %164, %166 : vector<8x32xf32>
    %170 = arith.addf %168, %169 : vector<8x32xf32>
    %171 = math.tanh %170 : vector<8x32xf32>
    %172 = arith.mulf %167, %171 : vector<8x32xf32>
    %173 = vector.extract_strided_slice %13 {offsets = [64, 0], sizes = [8, 128], strides = [1, 1]} : vector<128x128xf32> to vector<8x128xf32>
    %174 = arith.truncf %172 : vector<8x32xf32> to vector<8x32xbf16>
    %cst_27 = arith.constant dense<0.000000e+00> : vector<8x128xf32>
    %175 = tpu.matmul %174, %26, %cst_27 {dimension_numbers = #tpu.dot_dimension_numbers<[1], [0], [0], [1], [0, 0, 1, 1], [], []>} : vector<8x32xbf16>, vector<32x128xbf16>, vector<8x128xf32> -> vector<8x128xf32>
    %176 = arith.addf %173, %175 : vector<8x128xf32>
    %177 = math.tanh %176 : vector<8x128xf32>
    %178 = vector.broadcast %22 : vector<1x128xf32> to vector<8x128xf32>
    %179 = arith.mulf %178, %177 : vector<8x128xf32>
    %180 = vector.broadcast %25 : vector<1x128xf32> to vector<8x128xf32>
    %181 = arith.addf %179, %180 : vector<8x128xf32>
    %182 = vector.extract_strided_slice %181 {offsets = [0, 0], sizes = [8, 32], strides = [1, 1]} : vector<8x128xf32> to vector<8x32xf32>
    %183 = vector.extract_strided_slice %181 {offsets = [0, 32], sizes = [8, 32], strides = [1, 1]} : vector<8x128xf32> to vector<8x32xf32>
    %184 = vector.extract_strided_slice %181 {offsets = [0, 64], sizes = [8, 32], strides = [1, 1]} : vector<8x128xf32> to vector<8x32xf32>
    %185 = vector.extract_strided_slice %181 {offsets = [0, 96], sizes = [8, 32], strides = [1, 1]} : vector<8x128xf32> to vector<8x32xf32>
    %186 = arith.mulf %183, %170 : vector<8x32xf32>
    %187 = arith.mulf %182, %184 : vector<8x32xf32>
    %188 = arith.addf %186, %187 : vector<8x32xf32>
    %189 = math.tanh %188 : vector<8x32xf32>
    %190 = arith.mulf %185, %189 : vector<8x32xf32>
    %191 = vector.extract_strided_slice %13 {offsets = [72, 0], sizes = [8, 128], strides = [1, 1]} : vector<128x128xf32> to vector<8x128xf32>
    %192 = arith.truncf %190 : vector<8x32xf32> to vector<8x32xbf16>
    %cst_28 = arith.constant dense<0.000000e+00> : vector<8x128xf32>
    %193 = tpu.matmul %192, %26, %cst_28 {dimension_numbers = #tpu.dot_dimension_numbers<[1], [0], [0], [1], [0, 0, 1, 1], [], []>} : vector<8x32xbf16>, vector<32x128xbf16>, vector<8x128xf32> -> vector<8x128xf32>
    %194 = arith.addf %191, %193 : vector<8x128xf32>
    %195 = math.tanh %194 : vector<8x128xf32>
    %196 = vector.broadcast %22 : vector<1x128xf32> to vector<8x128xf32>
    %197 = arith.mulf %196, %195 : vector<8x128xf32>
    %198 = vector.broadcast %25 : vector<1x128xf32> to vector<8x128xf32>
    %199 = arith.addf %197, %198 : vector<8x128xf32>
    %200 = vector.extract_strided_slice %199 {offsets = [0, 0], sizes = [8, 32], strides = [1, 1]} : vector<8x128xf32> to vector<8x32xf32>
    %201 = vector.extract_strided_slice %199 {offsets = [0, 32], sizes = [8, 32], strides = [1, 1]} : vector<8x128xf32> to vector<8x32xf32>
    %202 = vector.extract_strided_slice %199 {offsets = [0, 64], sizes = [8, 32], strides = [1, 1]} : vector<8x128xf32> to vector<8x32xf32>
    %203 = vector.extract_strided_slice %199 {offsets = [0, 96], sizes = [8, 32], strides = [1, 1]} : vector<8x128xf32> to vector<8x32xf32>
    %204 = arith.mulf %201, %188 : vector<8x32xf32>
    %205 = arith.mulf %200, %202 : vector<8x32xf32>
    %206 = arith.addf %204, %205 : vector<8x32xf32>
    %207 = math.tanh %206 : vector<8x32xf32>
    %208 = arith.mulf %203, %207 : vector<8x32xf32>
    %209 = vector.extract_strided_slice %13 {offsets = [80, 0], sizes = [8, 128], strides = [1, 1]} : vector<128x128xf32> to vector<8x128xf32>
    %210 = arith.truncf %208 : vector<8x32xf32> to vector<8x32xbf16>
    %cst_29 = arith.constant dense<0.000000e+00> : vector<8x128xf32>
    %211 = tpu.matmul %210, %26, %cst_29 {dimension_numbers = #tpu.dot_dimension_numbers<[1], [0], [0], [1], [0, 0, 1, 1], [], []>} : vector<8x32xbf16>, vector<32x128xbf16>, vector<8x128xf32> -> vector<8x128xf32>
    %212 = arith.addf %209, %211 : vector<8x128xf32>
    %213 = math.tanh %212 : vector<8x128xf32>
    %214 = vector.broadcast %22 : vector<1x128xf32> to vector<8x128xf32>
    %215 = arith.mulf %214, %213 : vector<8x128xf32>
    %216 = vector.broadcast %25 : vector<1x128xf32> to vector<8x128xf32>
    %217 = arith.addf %215, %216 : vector<8x128xf32>
    %218 = vector.extract_strided_slice %217 {offsets = [0, 0], sizes = [8, 32], strides = [1, 1]} : vector<8x128xf32> to vector<8x32xf32>
    %219 = vector.extract_strided_slice %217 {offsets = [0, 32], sizes = [8, 32], strides = [1, 1]} : vector<8x128xf32> to vector<8x32xf32>
    %220 = vector.extract_strided_slice %217 {offsets = [0, 64], sizes = [8, 32], strides = [1, 1]} : vector<8x128xf32> to vector<8x32xf32>
    %221 = vector.extract_strided_slice %217 {offsets = [0, 96], sizes = [8, 32], strides = [1, 1]} : vector<8x128xf32> to vector<8x32xf32>
    %222 = arith.mulf %219, %206 : vector<8x32xf32>
    %223 = arith.mulf %218, %220 : vector<8x32xf32>
    %224 = arith.addf %222, %223 : vector<8x32xf32>
    %225 = math.tanh %224 : vector<8x32xf32>
    %226 = arith.mulf %221, %225 : vector<8x32xf32>
    %227 = vector.extract_strided_slice %13 {offsets = [88, 0], sizes = [8, 128], strides = [1, 1]} : vector<128x128xf32> to vector<8x128xf32>
    %228 = arith.truncf %226 : vector<8x32xf32> to vector<8x32xbf16>
    %cst_30 = arith.constant dense<0.000000e+00> : vector<8x128xf32>
    %229 = tpu.matmul %228, %26, %cst_30 {dimension_numbers = #tpu.dot_dimension_numbers<[1], [0], [0], [1], [0, 0, 1, 1], [], []>} : vector<8x32xbf16>, vector<32x128xbf16>, vector<8x128xf32> -> vector<8x128xf32>
    %230 = arith.addf %227, %229 : vector<8x128xf32>
    %231 = math.tanh %230 : vector<8x128xf32>
    %232 = vector.broadcast %22 : vector<1x128xf32> to vector<8x128xf32>
    %233 = arith.mulf %232, %231 : vector<8x128xf32>
    %234 = vector.broadcast %25 : vector<1x128xf32> to vector<8x128xf32>
    %235 = arith.addf %233, %234 : vector<8x128xf32>
    %236 = vector.extract_strided_slice %235 {offsets = [0, 0], sizes = [8, 32], strides = [1, 1]} : vector<8x128xf32> to vector<8x32xf32>
    %237 = vector.extract_strided_slice %235 {offsets = [0, 32], sizes = [8, 32], strides = [1, 1]} : vector<8x128xf32> to vector<8x32xf32>
    %238 = vector.extract_strided_slice %235 {offsets = [0, 64], sizes = [8, 32], strides = [1, 1]} : vector<8x128xf32> to vector<8x32xf32>
    %239 = vector.extract_strided_slice %235 {offsets = [0, 96], sizes = [8, 32], strides = [1, 1]} : vector<8x128xf32> to vector<8x32xf32>
    %240 = arith.mulf %237, %224 : vector<8x32xf32>
    %241 = arith.mulf %236, %238 : vector<8x32xf32>
    %242 = arith.addf %240, %241 : vector<8x32xf32>
    %243 = math.tanh %242 : vector<8x32xf32>
    %244 = arith.mulf %239, %243 : vector<8x32xf32>
    %245 = vector.extract_strided_slice %13 {offsets = [96, 0], sizes = [8, 128], strides = [1, 1]} : vector<128x128xf32> to vector<8x128xf32>
    %246 = arith.truncf %244 : vector<8x32xf32> to vector<8x32xbf16>
    %cst_31 = arith.constant dense<0.000000e+00> : vector<8x128xf32>
    %247 = tpu.matmul %246, %26, %cst_31 {dimension_numbers = #tpu.dot_dimension_numbers<[1], [0], [0], [1], [0, 0, 1, 1], [], []>} : vector<8x32xbf16>, vector<32x128xbf16>, vector<8x128xf32> -> vector<8x128xf32>
    %248 = arith.addf %245, %247 : vector<8x128xf32>
    %249 = math.tanh %248 : vector<8x128xf32>
    %250 = vector.broadcast %22 : vector<1x128xf32> to vector<8x128xf32>
    %251 = arith.mulf %250, %249 : vector<8x128xf32>
    %252 = vector.broadcast %25 : vector<1x128xf32> to vector<8x128xf32>
    %253 = arith.addf %251, %252 : vector<8x128xf32>
    %254 = vector.extract_strided_slice %253 {offsets = [0, 0], sizes = [8, 32], strides = [1, 1]} : vector<8x128xf32> to vector<8x32xf32>
    %255 = vector.extract_strided_slice %253 {offsets = [0, 32], sizes = [8, 32], strides = [1, 1]} : vector<8x128xf32> to vector<8x32xf32>
    %256 = vector.extract_strided_slice %253 {offsets = [0, 64], sizes = [8, 32], strides = [1, 1]} : vector<8x128xf32> to vector<8x32xf32>
    %257 = vector.extract_strided_slice %253 {offsets = [0, 96], sizes = [8, 32], strides = [1, 1]} : vector<8x128xf32> to vector<8x32xf32>
    %258 = arith.mulf %255, %242 : vector<8x32xf32>
    %259 = arith.mulf %254, %256 : vector<8x32xf32>
    %260 = arith.addf %258, %259 : vector<8x32xf32>
    %261 = math.tanh %260 : vector<8x32xf32>
    %262 = arith.mulf %257, %261 : vector<8x32xf32>
    %263 = vector.extract_strided_slice %13 {offsets = [104, 0], sizes = [8, 128], strides = [1, 1]} : vector<128x128xf32> to vector<8x128xf32>
    %264 = arith.truncf %262 : vector<8x32xf32> to vector<8x32xbf16>
    %cst_32 = arith.constant dense<0.000000e+00> : vector<8x128xf32>
    %265 = tpu.matmul %264, %26, %cst_32 {dimension_numbers = #tpu.dot_dimension_numbers<[1], [0], [0], [1], [0, 0, 1, 1], [], []>} : vector<8x32xbf16>, vector<32x128xbf16>, vector<8x128xf32> -> vector<8x128xf32>
    %266 = arith.addf %263, %265 : vector<8x128xf32>
    %267 = math.tanh %266 : vector<8x128xf32>
    %268 = vector.broadcast %22 : vector<1x128xf32> to vector<8x128xf32>
    %269 = arith.mulf %268, %267 : vector<8x128xf32>
    %270 = vector.broadcast %25 : vector<1x128xf32> to vector<8x128xf32>
    %271 = arith.addf %269, %270 : vector<8x128xf32>
    %272 = vector.extract_strided_slice %271 {offsets = [0, 0], sizes = [8, 32], strides = [1, 1]} : vector<8x128xf32> to vector<8x32xf32>
    %273 = vector.extract_strided_slice %271 {offsets = [0, 32], sizes = [8, 32], strides = [1, 1]} : vector<8x128xf32> to vector<8x32xf32>
    %274 = vector.extract_strided_slice %271 {offsets = [0, 64], sizes = [8, 32], strides = [1, 1]} : vector<8x128xf32> to vector<8x32xf32>
    %275 = vector.extract_strided_slice %271 {offsets = [0, 96], sizes = [8, 32], strides = [1, 1]} : vector<8x128xf32> to vector<8x32xf32>
    %276 = arith.mulf %273, %260 : vector<8x32xf32>
    %277 = arith.mulf %272, %274 : vector<8x32xf32>
    %278 = arith.addf %276, %277 : vector<8x32xf32>
    %279 = math.tanh %278 : vector<8x32xf32>
    %280 = arith.mulf %275, %279 : vector<8x32xf32>
    %281 = vector.extract_strided_slice %13 {offsets = [112, 0], sizes = [8, 128], strides = [1, 1]} : vector<128x128xf32> to vector<8x128xf32>
    %282 = arith.truncf %280 : vector<8x32xf32> to vector<8x32xbf16>
    %cst_33 = arith.constant dense<0.000000e+00> : vector<8x128xf32>
    %283 = tpu.matmul %282, %26, %cst_33 {dimension_numbers = #tpu.dot_dimension_numbers<[1], [0], [0], [1], [0, 0, 1, 1], [], []>} : vector<8x32xbf16>, vector<32x128xbf16>, vector<8x128xf32> -> vector<8x128xf32>
    %284 = arith.addf %281, %283 : vector<8x128xf32>
    %285 = math.tanh %284 : vector<8x128xf32>
    %286 = vector.broadcast %22 : vector<1x128xf32> to vector<8x128xf32>
    %287 = arith.mulf %286, %285 : vector<8x128xf32>
    %288 = vector.broadcast %25 : vector<1x128xf32> to vector<8x128xf32>
    %289 = arith.addf %287, %288 : vector<8x128xf32>
    %290 = vector.extract_strided_slice %289 {offsets = [0, 0], sizes = [8, 32], strides = [1, 1]} : vector<8x128xf32> to vector<8x32xf32>
    %291 = vector.extract_strided_slice %289 {offsets = [0, 32], sizes = [8, 32], strides = [1, 1]} : vector<8x128xf32> to vector<8x32xf32>
    %292 = vector.extract_strided_slice %289 {offsets = [0, 64], sizes = [8, 32], strides = [1, 1]} : vector<8x128xf32> to vector<8x32xf32>
    %293 = vector.extract_strided_slice %289 {offsets = [0, 96], sizes = [8, 32], strides = [1, 1]} : vector<8x128xf32> to vector<8x32xf32>
    %294 = arith.mulf %291, %278 : vector<8x32xf32>
    %295 = arith.mulf %290, %292 : vector<8x32xf32>
    %296 = arith.addf %294, %295 : vector<8x32xf32>
    %297 = math.tanh %296 : vector<8x32xf32>
    %298 = arith.mulf %293, %297 : vector<8x32xf32>
    %299 = vector.extract_strided_slice %13 {offsets = [120, 0], sizes = [8, 128], strides = [1, 1]} : vector<128x128xf32> to vector<8x128xf32>
    %300 = arith.truncf %298 : vector<8x32xf32> to vector<8x32xbf16>
    %cst_34 = arith.constant dense<0.000000e+00> : vector<8x128xf32>
    %301 = tpu.matmul %300, %26, %cst_34 {dimension_numbers = #tpu.dot_dimension_numbers<[1], [0], [0], [1], [0, 0, 1, 1], [], []>} : vector<8x32xbf16>, vector<32x128xbf16>, vector<8x128xf32> -> vector<8x128xf32>
    %302 = arith.addf %299, %301 : vector<8x128xf32>
    %303 = math.tanh %302 : vector<8x128xf32>
    %304 = vector.broadcast %22 : vector<1x128xf32> to vector<8x128xf32>
    %305 = arith.mulf %304, %303 : vector<8x128xf32>
    %306 = vector.broadcast %25 : vector<1x128xf32> to vector<8x128xf32>
    %307 = arith.addf %305, %306 : vector<8x128xf32>
    %308 = vector.extract_strided_slice %307 {offsets = [0, 0], sizes = [8, 32], strides = [1, 1]} : vector<8x128xf32> to vector<8x32xf32>
    %309 = vector.extract_strided_slice %307 {offsets = [0, 32], sizes = [8, 32], strides = [1, 1]} : vector<8x128xf32> to vector<8x32xf32>
    %310 = vector.extract_strided_slice %307 {offsets = [0, 64], sizes = [8, 32], strides = [1, 1]} : vector<8x128xf32> to vector<8x32xf32>
    %311 = vector.extract_strided_slice %307 {offsets = [0, 96], sizes = [8, 32], strides = [1, 1]} : vector<8x128xf32> to vector<8x32xf32>
    %312 = arith.mulf %309, %296 : vector<8x32xf32>
    %313 = arith.mulf %308, %310 : vector<8x32xf32>
    %314 = arith.addf %312, %313 : vector<8x32xf32>
    %315 = math.tanh %314 : vector<8x32xf32>
    %316 = arith.mulf %311, %315 : vector<8x32xf32>
    %317 = arith.truncf %316 : vector<8x32xf32> to vector<8x32xbf16>
    %c0_35 = arith.constant 0 : index
    %c0_36 = arith.constant 0 : index
    %318 = vector.load %arg6[%c0_35, %c0_36] : memref<32x64xbf16, #tpu.memory_space<vmem>>, vector<32x64xbf16>
    %cst_37 = arith.constant dense<0.000000e+00> : vector<8x64xf32>
    %319 = tpu.matmul %317, %318, %cst_37 {dimension_numbers = #tpu.dot_dimension_numbers<[1], [0], [0], [1], [0, 0, 1, 1], [], []>} : vector<8x32xbf16>, vector<32x64xbf16>, vector<8x64xf32> -> vector<8x64xf32>
    %c0_38 = arith.constant 0 : index
    %c0_39 = arith.constant 0 : index
    %320 = vector.load %arg7[%c0_38, %c0_39] : memref<1x64xf32, #tpu.memory_space<vmem>>, vector<1x64xf32>
    %321 = vector.broadcast %320 : vector<1x64xf32> to vector<8x64xf32>
    %322 = arith.addf %319, %321 : vector<8x64xf32>
    %cst_40 = arith.constant 0.000000e+00 : f32
    %323 = vector.broadcast %cst_40 : f32 to vector<8x64xf32>
    %324 = arith.maximumf %322, %323 : vector<8x64xf32>
    %325 = arith.truncf %324 : vector<8x64xf32> to vector<8x64xbf16>
    %c0_41 = arith.constant 0 : index
    %c0_42 = arith.constant 0 : index
    %326 = vector.load %arg8[%c0_41, %c0_42] : memref<64x128xbf16, #tpu.memory_space<vmem>>, vector<64x128xbf16>
    %cst_43 = arith.constant dense<0.000000e+00> : vector<8x128xf32>
    %327 = tpu.matmul %325, %326, %cst_43 {dimension_numbers = #tpu.dot_dimension_numbers<[1], [0], [0], [1], [0, 0, 1, 1], [], []>} : vector<8x64xbf16>, vector<64x128xbf16>, vector<8x128xf32> -> vector<8x128xf32>
    %c0_44 = arith.constant 0 : index
    %c0_45 = arith.constant 0 : index
    %328 = vector.load %arg9[%c0_44, %c0_45] : memref<1x128xf32, #tpu.memory_space<vmem>>, vector<1x128xf32>
    %329 = vector.broadcast %328 : vector<1x128xf32> to vector<8x128xf32>
    %330 = arith.addf %327, %329 : vector<8x128xf32>
    %c0_46 = arith.constant 0 : index
    %c0_47 = arith.constant 0 : index
    %331 = vector.load %arg10[%c0_46, %c0_47] : memref<8x128xf32, #tpu.memory_space<vmem>>, vector<8x128xf32>
    tpu.vector_store %arg10[%c0_46, %c0_47], %330 {strides = array<i32>} : memref<8x128xf32, #tpu.memory_space<vmem>>, vector<8x128xf32>,
    return
  }
}

</mosaic_0001>

<llo_original>
// kernel: cnn_lstm_forward.1
$region0: #{cnn_lstm_forward.1}
  #allocation0 [shape = 'u32[]', space=smem, size = 0x4, offset = 0x4, fixed_abs, tag = 'smem constant byte address 0x4 - core index']
  #allocation1 [shape = 'u32[72,128]{1,0:T(1,128)}', space=vmem, size = 0x9000, scoped, tag = 'internal scratch']
  %s0 = inlined_call_operand.vmem [shape: bf16[128,32], index: 0, kind: input, shape index: {}]
  %s1 = inlined_call_operand.vmem [shape: bf16[32,32], index: 1, kind: input, shape index: {}]
  %s2 = inlined_call_operand.vmem [shape: f32[1,32], index: 2, kind: input, shape index: {}]
  %s3 = inlined_call_operand.vmem [shape: bf16[32,128], index: 3, kind: input, shape index: {}]
  %s4 = inlined_call_operand.vmem [shape: f32[1,128], index: 4, kind: input, shape index: {}]
  %s5 = inlined_call_operand.vmem [shape: bf16[32,128], index: 5, kind: input, shape index: {}]
  %s6 = inlined_call_operand.vmem [shape: bf16[32,64], index: 6, kind: input, shape index: {}]
  %s7 = inlined_call_operand.vmem [shape: f32[1,64], index: 7, kind: input, shape index: {}]
  %s8 = inlined_call_operand.vmem [shape: bf16[64,128], index: 8, kind: input, shape index: {}]
  %s9 = inlined_call_operand.vmem [shape: f32[1,128], index: 9, kind: input, shape index: {}]
  %s10 = inlined_call_operand.vmem [shape: f32[8,128], index: 10, kind: output, shape index: {}]
  %s11 = sld [smem:[#allocation0]]
  $region50: #{cnn_lstm_forward.1} parent=0
    _
  %s13 = ssub.s32 1, %s11
  %s14 = scalar_select 0, %s13, %s11
  // Predicated region
  $region2: #{cnn_lstm_forward.1} parent=0 // pred_check
    _
  $region3: #{cnn_lstm_forward.1} parent=0 // pred_check_branch
    %16 = sbr.rel (0) target = $region5
  $region4: #{cnn_lstm_forward.1} parent=0 // pred_region
    _
  $region5: #{cnn_lstm_forward.1} parent=0 // pred_fallthru
    _
  // Predicated region
  $region6: #{cnn_lstm_forward.1} parent=0 // pred_check
    _
  $region7: #{cnn_lstm_forward.1} parent=0 // pred_check_branch
    %18 = sbr.rel (0) target = $region9
  $region8: #{cnn_lstm_forward.1} parent=0 // pred_region
    _
  $region9: #{cnn_lstm_forward.1} parent=0 // pred_fallthru
    _
  // Predicated region
  $region10: #{cnn_lstm_forward.1} parent=0 // pred_check
    _
  $region11: #{cnn_lstm_forward.1} parent=0 // pred_check_branch
    %20 = sbr.rel (0) target = $region13
  $region12: #{cnn_lstm_forward.1} parent=0 // pred_region
    _
  $region13: #{cnn_lstm_forward.1} parent=0 // pred_fallthru
    _
  // Predicated region
  $region14: #{cnn_lstm_forward.1} parent=0 // pred_check
    _
  $region15: #{cnn_lstm_forward.1} parent=0 // pred_check_branch
    %22 = sbr.rel (0) target = $region17
  $region16: #{cnn_lstm_forward.1} parent=0 // pred_region
    _
  $region17: #{cnn_lstm_forward.1} parent=0 // pred_fallthru
    _
  // Predicated region
  $region18: #{cnn_lstm_forward.1} parent=0 // pred_check
    _
  $region19: #{cnn_lstm_forward.1} parent=0 // pred_check_branch
    %24 = sbr.rel (0) target = $region21
  $region20: #{cnn_lstm_forward.1} parent=0 // pred_region
    _
  $region21: #{cnn_lstm_forward.1} parent=0 // pred_fallthru
    _
  // Predicated region
  $region22: #{cnn_lstm_forward.1} parent=0 // pred_check
    _
  $region23: #{cnn_lstm_forward.1} parent=0 // pred_check_branch
    %26 = sbr.rel (0) target = $region25
  $region24: #{cnn_lstm_forward.1} parent=0 // pred_region
    _
  $region25: #{cnn_lstm_forward.1} parent=0 // pred_fallthru
    _
  // Predicated region
  $region26: #{cnn_lstm_forward.1} parent=0 // pred_check
    _
  $region27: #{cnn_lstm_forward.1} parent=0 // pred_check_branch
    %28 = sbr.rel (0) target = $region29
  $region28: #{cnn_lstm_forward.1} parent=0 // pred_region
    _
  $region29: #{cnn_lstm_forward.1} parent=0 // pred_fallthru
    _
  // Predicated region
  $region30: #{cnn_lstm_forward.1} parent=0 // pred_check
    _
  $region31: #{cnn_lstm_forward.1} parent=0 // pred_check_branch
    %30 = sbr.rel (0) target = $region33
  $region32: #{cnn_lstm_forward.1} parent=0 // pred_region
    _
  $region33: #{cnn_lstm_forward.1} parent=0 // pred_fallthru
    _
  // Predicated region
  $region34: #{cnn_lstm_forward.1} parent=0 // pred_check
    _
  $region35: #{cnn_lstm_forward.1} parent=0 // pred_check_branch
    %32 = sbr.rel (0) target = $region37
  $region36: #{cnn_lstm_forward.1} parent=0 // pred_region
    _
  $region37: #{cnn_lstm_forward.1} parent=0 // pred_fallthru
    _
  // Predicated region
  $region38: #{cnn_lstm_forward.1} parent=0 // pred_check
    _
  $region39: #{cnn_lstm_forward.1} parent=0 // pred_check_branch
    %34 = sbr.rel (0) target = $region41
  $region40: #{cnn_lstm_forward.1} parent=0 // pred_region
    _
  $region41: #{cnn_lstm_forward.1} parent=0 // pred_fallthru
    _
  %v36 = vld [vmem:[%s0] sm:$0xf]
  %v37 = vld [vmem:[%s0 + $0x4] sm:$0xf]
  %v38 = vld [vmem:[%s0 + $0x8] sm:$0xf]
  %v39 = vld [vmem:[%s0 + $0xc] sm:$0xf]
  %v40 = vld [vmem:[%s0 + $0x10] sm:$0xf]
  %v41 = vld [vmem:[%s0 + $0x14] sm:$0xf]
  %v42 = vld [vmem:[%s0 + $0x18] sm:$0xf]
  %v43 = vld [vmem:[%s0 + $0x1c] sm:$0xf]
  %v44 = vld [vmem:[%s0 + $0x20] sm:$0xf]
  %v45 = vld [vmem:[%s0 + $0x24] sm:$0xf]
  %v46 = vld [vmem:[%s0 + $0x28] sm:$0xf]
  %v47 = vld [vmem:[%s0 + $0x2c] sm:$0xf]
  %v48 = vld [vmem:[%s0 + $0x30] sm:$0xf]
  %v49 = vld [vmem:[%s0 + $0x34] sm:$0xf]
  %v50 = vld [vmem:[%s0 + $0x38] sm:$0xf]
  %v51 = vld [vmem:[%s0 + $0x3c] sm:$0xf]
  %v52 = vld [vmem:[%s1] sm:$0xf]
  %v53 = vld [vmem:[%s1 + $0x4] sm:$0xf]
  %v54 = vld [vmem:[%s1 + $0x8] sm:$0xf]
  %v55 = vld [vmem:[%s1 + $0xc] sm:$0xf]
  %v56 = vld [vmem:[%s2] sm:$0x1]
  %v58 = vperm.slane %v56, 0
  %v76 = vunpack.c.l.b16 %v36
  %v77 = vunpack.c.l.b16 %v37
  %v78 = vunpack.c.l.b16 %v38
  %v79 = vunpack.c.l.b16 %v39
  %v80 = vunpack.c.l.b16 %v40
  %v81 = vunpack.c.l.b16 %v41
  %v82 = vunpack.c.l.b16 %v42
  %v83 = vunpack.c.l.b16 %v43
  %v84 = vunpack.c.l.b16 %v44
  %v85 = vunpack.c.l.b16 %v45
  %v86 = vunpack.c.l.b16 %v46
  %v87 = vunpack.c.l.b16 %v47
  %v88 = vunpack.c.l.b16 %v48
  %v89 = vunpack.c.l.b16 %v49
  %v90 = vunpack.c.l.b16 %v50
  %v91 = vunpack.c.l.b16 %v51
  %v92 = vpack.c.b16 %v77, %v76
  %v93 = vpack.c.b16 %v79, %v78
  %v94 = vpack.c.b16 %v81, %v80
  %v95 = vpack.c.b16 %v83, %v82
  %v96 = vpack.c.b16 %v85, %v84
  %v97 = vpack.c.b16 %v87, %v86
  %v98 = vpack.c.b16 %v89, %v88
  %v99 = vpack.c.b16 %v91, %v90
  %v104 = vunpack.c.l.b16 %v52
  %v105 = vunpack.c.l.b16 %v53
  %v106 = vunpack.c.l.b16 %v54
  %v107 = vunpack.c.l.b16 %v55
  %v108 = vpack.c.b16 %v105, %v104
  %v109 = vpack.c.b16 %v107, %v106
  %vm112 = vcmask 261120
  %v114 = vsel %vm112, %v92, 0
  %v117 = vsel %vm112, %v93, 0
  %v120 = vsel %vm112, %v94, 0
  %v123 = vsel %vm112, %v95, 0
  %v126 = vsel %vm112, %v96, 0
  %v129 = vsel %vm112, %v97, 0
  %v132 = vsel %vm112, %v98, 0
  %v135 = vsel %vm112, %v99, 0
  %137 = vmatpush.bf16.msra.mxu0 0
  %138 = vmatpush.bf16.msra.mxu0 0
  %139 = vmatpush.bf16.msra.mxu0 0
  %140 = vmatpush.bf16.msra.mxu0 0
  %141 = vmatpush.bf16.msra.mxu0 0
  %142 = vmatpush.bf16.msra.mxu0 0
  %143 = vmatpush.bf16.msra.mxu0 %v109
  %144 = vmatpush.bf16.msra.mxu0 %v108
  %145 = vmatmul.bf16.gmra.mxu0 %v114
  %v146 = vpop.f32.mrf.mxu0
  %v147 = vadd.f32 %v58, %v146
  %v148 = vpop.f32.mrf.mxu0
  %v149 = vadd.f32 %v58, %v148
  %150 = vmatmul.bf16.gmra.mxu0 %v117
  %v151 = vpop.f32.mrf.mxu0
  %v152 = vadd.f32 %v58, %v151
  %v153 = vpop.f32.mrf.mxu0
  %v154 = vadd.f32 %v58, %v153
  %155 = vmatmul.bf16.gmra.mxu0 %v120
  %v156 = vpop.f32.mrf.mxu0
  %v157 = vadd.f32 %v58, %v156
  %v158 = vpop.f32.mrf.mxu0
  %v159 = vadd.f32 %v58, %v158
  %160 = vmatmul.bf16.gmra.mxu0 %v123
  %v161 = vpop.f32.mrf.mxu0
  %v162 = vadd.f32 %v58, %v161
  %v163 = vpop.f32.mrf.mxu0
  %v164 = vadd.f32 %v58, %v163
  %165 = vmatmul.bf16.gmra.mxu0 %v126
  %v166 = vpop.f32.mrf.mxu0
  %v167 = vadd.f32 %v58, %v166
  %v168 = vpop.f32.mrf.mxu0
  %v169 = vadd.f32 %v58, %v168
  %170 = vmatmul.bf16.gmra.mxu0 %v129
  %v171 = vpop.f32.mrf.mxu0
  %v172 = vadd.f32 %v58, %v171
  %v173 = vpop.f32.mrf.mxu0
  %v174 = vadd.f32 %v58, %v173
  %175 = vmatmul.bf16.gmra.mxu0 %v132
  %v176 = vpop.f32.mrf.mxu0
  %v177 = vadd.f32 %v58, %v176
  %v178 = vpop.f32.mrf.mxu0
  %v179 = vadd.f32 %v58, %v178
  %180 = vmatmul.bf16.gmra.mxu0 %v135
  %v181 = vpop.f32.mrf.mxu0
  %v182 = vadd.f32 %v58, %v181
  %v183 = vpop.f32.mrf.mxu0
  %v184 = vadd.f32 %v58, %v183
  %185 = vdwg.mxu0
  %v186 = vmax.f32 %v147, 0.0
  %v187 = vmax.f32 %v149, 0.0
  %v188 = vmax.f32 %v152, 0.0
  %v189 = vmax.f32 %v154, 0.0
  %v190 = vmax.f32 %v157, 0.0
  %v191 = vmax.f32 %v159, 0.0
  %v192 = vmax.f32 %v162, 0.0
  %v193 = vmax.f32 %v164, 0.0
  %v194 = vmax.f32 %v167, 0.0
  %v195 = vmax.f32 %v169, 0.0
  %v196 = vmax.f32 %v172, 0.0
  %v197 = vmax.f32 %v174, 0.0
  %v198 = vmax.f32 %v177, 0.0
  %v199 = vmax.f32 %v179, 0.0
  %v200 = vmax.f32 %v182, 0.0
  %v201 = vmax.f32 %v184, 0.0
  %v202 = vpack.c.bf16 %v187, %v186
  %v203 = vpack.c.bf16 %v189, %v188
  %v204 = vpack.c.bf16 %v191, %v190
  %v205 = vpack.c.bf16 %v193, %v192
  %v206 = vpack.c.bf16 %v195, %v194
  %v207 = vpack.c.bf16 %v197, %v196
  %v208 = vpack.c.bf16 %v199, %v198
  %v209 = vpack.c.bf16 %v201, %v200
  %v210 = vld [vmem:[%s3] sm:$0xf]
  %v211 = vld [vmem:[%s3 + $0x4] sm:$0xf]
  %v212 = vld [vmem:[%s3 + $0x8] sm:$0xf]
  %v213 = vld [vmem:[%s3 + $0xc] sm:$0xf]
  %v214 = vld [vmem:[%s4] sm:$0x1]
  %v216 = vperm.slane %v214, 0
  %v222 = vunpack.c.l.b16 %v210
  %v223 = vunpack.c.l.b16 %v211
  %v224 = vunpack.c.l.b16 %v212
  %v225 = vunpack.c.l.b16 %v213
  %v226 = vpack.c.b16 %v223, %v222
  %v227 = vpack.c.b16 %v225, %v224
  %v231 = vsel %vm112, %v202, 0
  %v234 = vsel %vm112, %v203, 0
  %v237 = vsel %vm112, %v204, 0
  %v240 = vsel %vm112, %v205, 0
  %v243 = vsel %vm112, %v206, 0
  %v246 = vsel %vm112, %v207, 0
  %v249 = vsel %vm112, %v208, 0
  %v252 = vsel %vm112, %v209, 0
  %254 = vmatpush.bf16.msra.mxu0 0
  %255 = vmatpush.bf16.msra.mxu0 0
  %256 = vmatpush.bf16.msra.mxu0 0
  %257 = vmatpush.bf16.msra.mxu0 0
  %258 = vmatpush.bf16.msra.mxu0 0
  %259 = vmatpush.bf16.msra.mxu0 0
  %260 = vmatpush.bf16.msra.mxu0 %v227
  %261 = vmatpush.bf16.msra.mxu0 %v226
  %262 = vmatmul.bf16.gmra.mxu0 %v231
  %v263 = vpop.f32.mrf.mxu0
  %v264 = vadd.f32 %v216, %v263
  %v265 = vpop.f32.mrf.mxu0
  %v266 = vadd.f32 %v216, %v265
  %267 = vmatmul.bf16.gmra.mxu0 %v234
  %v268 = vpop.f32.mrf.mxu0
  %v269 = vadd.f32 %v216, %v268
  %v270 = vpop.f32.mrf.mxu0
  %v271 = vadd.f32 %v216, %v270
  %272 = vmatmul.bf16.gmra.mxu0 %v237
  %v273 = vpop.f32.mrf.mxu0
  %v274 = vadd.f32 %v216, %v273
  %v275 = vpop.f32.mrf.mxu0
  %v276 = vadd.f32 %v216, %v275
  %277 = vmatmul.bf16.gmra.mxu0 %v240
  %v278 = vpop.f32.mrf.mxu0
  %v279 = vadd.f32 %v216, %v278
  %v280 = vpop.f32.mrf.mxu0
  %v281 = vadd.f32 %v216, %v280
  %282 = vmatmul.bf16.gmra.mxu0 %v243
  %v283 = vpop.f32.mrf.mxu0
  %v284 = vadd.f32 %v216, %v283
  %v285 = vpop.f32.mrf.mxu0
  %v286 = vadd.f32 %v216, %v285
  %287 = vmatmul.bf16.gmra.mxu0 %v246
  %v288 = vpop.f32.mrf.mxu0
  %v289 = vadd.f32 %v216, %v288
  %v290 = vpop.f32.mrf.mxu0
  %v291 = vadd.f32 %v216, %v290
  %292 = vmatmul.bf16.gmra.mxu0 %v249
  %v293 = vpop.f32.mrf.mxu0
  %v294 = vadd.f32 %v216, %v293
  %v295 = vpop.f32.mrf.mxu0
  %v296 = vadd.f32 %v216, %v295
  %297 = vmatmul.bf16.gmra.mxu0 %v252
  %v298 = vpop.f32.mrf.mxu0
  %v299 = vadd.f32 %v216, %v298
  %v300 = vpop.f32.mrf.mxu0
  %v301 = vadd.f32 %v216, %v300
  %302 = vdwg.mxu0
  %v303 = vlaneseq
  %v304 = vand.u32 %v303, 127
  %vm305 = vcmp.ge.s32.totalorder %v304, 64
  %vm306 = vcmp.lt.s32.totalorder %v304, 96
  %vm307 = vmand %vm305, %vm306
  %v308 = vsel %vm307, 1.0, 0.5
  %v309 = vsel %vm307, 0.0, 0.5
  %v310 = vld [vmem:[%s5] sm:$0xf]
  %v311 = vld [vmem:[%s5 + $0x4] sm:$0xf]
  %v312 = vld [vmem:[%s5 + $0x8] sm:$0xf]
  %v313 = vld [vmem:[%s5 + $0xc] sm:$0xf]
  %v318 = vunpack.c.l.b16 %v310
  %v319 = vunpack.c.l.b16 %v311
  %v320 = vunpack.c.l.b16 %v312
  %v321 = vunpack.c.l.b16 %v313
  %v322 = vpack.c.b16 %v319, %v318
  %v323 = vpack.c.b16 %v321, %v320
  %v327 = vsel %vm112, 0, 0
  %329 = vmatpush.bf16.msra.mxu0 0
  %330 = vmatpush.bf16.msra.mxu0 0
  %331 = vmatpush.bf16.msra.mxu0 0
  %332 = vmatpush.bf16.msra.mxu0 0
  %333 = vmatpush.bf16.msra.mxu0 0
  %334 = vmatpush.bf16.msra.mxu0 0
  %335 = vmatpush.bf16.msra.mxu0 %v323
  %336 = vmatpush.bf16.msra.mxu0 %v322
  %337 = vmatmul.bf16.gmra.mxu0 %v327
  %v338 = vpop.f32.mrf.mxu0
  %v339 = vadd.f32 0.0, %v338
  %v340 = vpop.f32.mrf.mxu0
  %341 = vdwg.mxu0
  %v342 = vadd.f32 %v264, %v339
  %v343 = vtanh.pop %v342
  %v344 = vmul.f32 %v308, %v343
  %v345 = vadd.f32 %v344, %v309
  %v346 = vmul.f32 %v345, 0.0
  %348 = vrot.lane.b32.xlu0 %v345, 64
  %v349 = vpop.permute.xlu0 %348
  %v351 = vmul.f32 %v345, %v349
  %353 = vrot.lane.b32.xlu0 %v351, 32
  %v354 = vpop.permute.xlu0 %353
  %v356 = vadd.f32 %v346, %v354
  %v357 = vtanh.pop %v356
  %359 = vrot.lane.b32.xlu0 %v357, 64
  %v360 = vpop.permute.xlu0 %359
  %v362 = vmul.f32 %v345, %v360
  %v363 = vpack.c.bf16 %v362, %v362
  %365 = vrot.lane.b32.xlu0 %v363, 32
  %v366 = vpop.permute.xlu0 %365
  %v368 = vsel %vm112, %v366, 0
  %370 = vmatpush.bf16.msra.mxu0 0
  %371 = vmatpush.bf16.msra.mxu0 0
  %372 = vmatpush.bf16.msra.mxu0 0
  %373 = vmatpush.bf16.msra.mxu0 0
  %374 = vmatpush.bf16.msra.mxu0 0
  %375 = vmatpush.bf16.msra.mxu0 0
  %376 = vmatpush.bf16.msra.mxu0 %v323
  %377 = vmatpush.bf16.msra.mxu0 %v322
  %378 = vmatmul.bf16.gmra.mxu0 %v368
  %v379 = vpop.f32.mrf.mxu0
  %v380 = vadd.f32 0.0, %v379
  %v381 = vpop.f32.mrf.mxu0
  %382 = vdwg.mxu0
  %v383 = vadd.f32 %v266, %v380
  %v384 = vtanh.pop %v383
  %v385 = vmul.f32 %v308, %v384
  %v386 = vadd.f32 %v385, %v309
  %v387 = vmul.f32 %v386, %v356
  %389 = vrot.lane.b32.xlu0 %v386, 64
  %v390 = vpop.permute.xlu0 %389
  %v392 = vmul.f32 %v386, %v390
  %394 = vrot.lane.b32.xlu0 %v392, 32
  %v395 = vpop.permute.xlu0 %394
  %v397 = vadd.f32 %v387, %v395
  %v398 = vtanh.pop %v397
  %400 = vrot.lane.b32.xlu0 %v398, 64
  %v401 = vpop.permute.xlu0 %400
  %v403 = vmul.f32 %v386, %v401
  %v404 = vpack.c.bf16 %v403, %v403
  %406 = vrot.lane.b32.xlu0 %v404, 32
  %v407 = vpop.permute.xlu0 %406
  %v409 = vsel %vm112, %v407, 0
  %411 = vmatpush.bf16.msra.mxu0 0
  %412 = vmatpush.bf16.msra.mxu0 0
  %413 = vmatpush.bf16.msra.mxu0 0
  %414 = vmatpush.bf16.msra.mxu0 0
  %415 = vmatpush.bf16.msra.mxu0 0
  %416 = vmatpush.bf16.msra.mxu0 0
  %417 = vmatpush.bf16.msra.mxu0 %v323
  %418 = vmatpush.bf16.msra.mxu0 %v322
  %419 = vmatmul.bf16.gmra.mxu0 %v409
  %v420 = vpop.f32.mrf.mxu0
  %v421 = vadd.f32 0.0, %v420
  %v422 = vpop.f32.mrf.mxu0
  %423 = vdwg.mxu0
  %v424 = vadd.f32 %v269, %v421
  %v425 = vtanh.pop %v424
  %v426 = vmul.f32 %v308, %v425
  %v427 = vadd.f32 %v426, %v309
  %v428 = vmul.f32 %v427, %v397
  %430 = vrot.lane.b32.xlu0 %v427, 64
  %v431 = vpop.permute.xlu0 %430
  %v433 = vmul.f32 %v427, %v431
  %435 = vrot.lane.b32.xlu0 %v433, 32
  %v436 = vpop.permute.xlu0 %435
  %v438 = vadd.f32 %v428, %v436
  %v439 = vtanh.pop %v438
  %441 = vrot.lane.b32.xlu0 %v439, 64
  %v442 = vpop.permute.xlu0 %441
  %v444 = vmul.f32 %v427, %v442
  %v445 = vpack.c.bf16 %v444, %v444
  %447 = vrot.lane.b32.xlu0 %v445, 32
  %v448 = vpop.permute.xlu0 %447
  %v450 = vsel %vm112, %v448, 0
  %452 = vmatpush.bf16.msra.mxu0 0
  %453 = vmatpush.bf16.msra.mxu0 0
  %454 = vmatpush.bf16.msra.mxu0 0
  %455 = vmatpush.bf16.msra.mxu0 0
  %456 = vmatpush.bf16.msra.mxu0 0
  %457 = vmatpush.bf16.msra.mxu0 0
  %458 = vmatpush.bf16.msra.mxu0 %v323
  %459 = vmatpush.bf16.msra.mxu0 %v322
  %460 = vmatmul.bf16.gmra.mxu0 %v450
  %v461 = vpop.f32.mrf.mxu0
  %v462 = vadd.f32 0.0, %v461
  %v463 = vpop.f32.mrf.mxu0
  %464 = vdwg.mxu0
  %v465 = vadd.f32 %v271, %v462
  %v466 = vtanh.pop %v465
  %v467 = vmul.f32 %v308, %v466
  %v468 = vadd.f32 %v467, %v309
  %v469 = vmul.f32 %v468, %v438
  %471 = vrot.lane.b32.xlu0 %v468, 64
  %v472 = vpop.permute.xlu0 %471
  %v474 = vmul.f32 %v468, %v472
  %476 = vrot.lane.b32.xlu0 %v474, 32
  %v477 = vpop.permute.xlu0 %476
  %v479 = vadd.f32 %v469, %v477
  %v480 = vtanh.pop %v479
  %482 = vrot.lane.b32.xlu0 %v480, 64
  %v483 = vpop.permute.xlu0 %482
  %v485 = vmul.f32 %v468, %v483
  %v486 = vpack.c.bf16 %v485, %v485
  %488 = vrot.lane.b32.xlu0 %v486, 32
  %v489 = vpop.permute.xlu0 %488
  %v491 = vsel %vm112, %v489, 0
  %493 = vmatpush.bf16.msra.mxu0 0
  %494 = vmatpush.bf16.msra.mxu0 0
  %495 = vmatpush.bf16.msra.mxu0 0
  %496 = vmatpush.bf16.msra.mxu0 0
  %497 = vmatpush.bf16.msra.mxu0 0
  %498 = vmatpush.bf16.msra.mxu0 0
  %499 = vmatpush.bf16.msra.mxu0 %v323
  %500 = vmatpush.bf16.msra.mxu0 %v322
  %501 = vmatmul.bf16.gmra.mxu0 %v491
  %v502 = vpop.f32.mrf.mxu0
  %v503 = vadd.f32 0.0, %v502
  %v504 = vpop.f32.mrf.mxu0
  %505 = vdwg.mxu0
  %v506 = vadd.f32 %v274, %v503
  %v507 = vtanh.pop %v506
  %v508 = vmul.f32 %v308, %v507
  %v509 = vadd.f32 %v508, %v309
  %v510 = vmul.f32 %v509, %v479
  %512 = vrot.lane.b32.xlu0 %v509, 64
  %v513 = vpop.permute.xlu0 %512
  %v515 = vmul.f32 %v509, %v513
  %517 = vrot.lane.b32.xlu0 %v515, 32
  %v518 = vpop.permute.xlu0 %517
  %v520 = vadd.f32 %v510, %v518
  %v521 = vtanh.pop %v520
  %523 = vrot.lane.b32.xlu0 %v521, 64
  %v524 = vpop.permute.xlu0 %523
  %v526 = vmul.f32 %v509, %v524
  %v527 = vpack.c.bf16 %v526, %v526
  %529 = vrot.lane.b32.xlu0 %v527, 32
  %v530 = vpop.permute.xlu0 %529
  %v532 = vsel %vm112, %v530, 0
  %534 = vmatpush.bf16.msra.mxu0 0
  %535 = vmatpush.bf16.msra.mxu0 0
  %536 = vmatpush.bf16.msra.mxu0 0
  %537 = vmatpush.bf16.msra.mxu0 0
  %538 = vmatpush.bf16.msra.mxu0 0
  %539 = vmatpush.bf16.msra.mxu0 0
  %540 = vmatpush.bf16.msra.mxu0 %v323
  %541 = vmatpush.bf16.msra.mxu0 %v322
  %542 = vmatmul.bf16.gmra.mxu0 %v532
  %v543 = vpop.f32.mrf.mxu0
  %v544 = vadd.f32 0.0, %v543
  %v545 = vpop.f32.mrf.mxu0
  %546 = vdwg.mxu0
  %v547 = vadd.f32 %v276, %v544
  %v548 = vtanh.pop %v547
  %v549 = vmul.f32 %v308, %v548
  %v550 = vadd.f32 %v549, %v309
  %v551 = vmul.f32 %v550, %v520
  %553 = vrot.lane.b32.xlu0 %v550, 64
  %v554 = vpop.permute.xlu0 %553
  %v556 = vmul.f32 %v550, %v554
  %558 = vrot.lane.b32.xlu0 %v556, 32
  %v559 = vpop.permute.xlu0 %558
  %v561 = vadd.f32 %v551, %v559
  %v562 = vtanh.pop %v561
  %564 = vrot.lane.b32.xlu0 %v562, 64
  %v565 = vpop.permute.xlu0 %564
  %v567 = vmul.f32 %v550, %v565
  %v568 = vpack.c.bf16 %v567, %v567
  %570 = vrot.lane.b32.xlu0 %v568, 32
  %v571 = vpop.permute.xlu0 %570
  %v573 = vsel %vm112, %v571, 0
  %575 = vmatpush.bf16.msra.mxu0 0
  %576 = vmatpush.bf16.msra.mxu0 0
  %577 = vmatpush.bf16.msra.mxu0 0
  %578 = vmatpush.bf16.msra.mxu0 0
  %579 = vmatpush.bf16.msra.mxu0 0
  %580 = vmatpush.bf16.msra.mxu0 0
  %581 = vmatpush.bf16.msra.mxu0 %v323
  %582 = vmatpush.bf16.msra.mxu0 %v322
  %583 = vmatmul.bf16.gmra.mxu0 %v573
  %v584 = vpop.f32.mrf.mxu0
  %v585 = vadd.f32 0.0, %v584
  %v586 = vpop.f32.mrf.mxu0
  %587 = vdwg.mxu0
  %v588 = vadd.f32 %v279, %v585
  %v589 = vtanh.pop %v588
  %v590 = vmul.f32 %v308, %v589
  %v591 = vadd.f32 %v590, %v309
  %v592 = vmul.f32 %v591, %v561
  %594 = vrot.lane.b32.xlu0 %v591, 64
  %v595 = vpop.permute.xlu0 %594
  %v597 = vmul.f32 %v591, %v595
  %599 = vrot.lane.b32.xlu0 %v597, 32
  %v600 = vpop.permute.xlu0 %599
  %v602 = vadd.f32 %v592, %v600
  %v603 = vtanh.pop %v602
  %605 = vrot.lane.b32.xlu0 %v603, 64
  %v606 = vpop.permute.xlu0 %605
  %v608 = vmul.f32 %v591, %v606
  %v609 = vpack.c.bf16 %v608, %v608
  %611 = vrot.lane.b32.xlu0 %v609, 32
  %v612 = vpop.permute.xlu0 %611
  %v614 = vsel %vm112, %v612, 0
  %616 = vmatpush.bf16.msra.mxu0 0
  %617 = vmatpush.bf16.msra.mxu0 0
  %618 = vmatpush.bf16.msra.mxu0 0
  %619 = vmatpush.bf16.msra.mxu0 0
  %620 = vmatpush.bf16.msra.mxu0 0
  %621 = vmatpush.bf16.msra.mxu0 0
  %622 = vmatpush.bf16.msra.mxu0 %v323
  %623 = vmatpush.bf16.msra.mxu0 %v322
  %624 = vmatmul.bf16.gmra.mxu0 %v614
  %v625 = vpop.f32.mrf.mxu0
  %v626 = vadd.f32 0.0, %v625
  %v627 = vpop.f32.mrf.mxu0
  %628 = vdwg.mxu0
  %v629 = vadd.f32 %v281, %v626
  %v630 = vtanh.pop %v629
  %v631 = vmul.f32 %v308, %v630
  %v632 = vadd.f32 %v631, %v309
  %v633 = vmul.f32 %v632, %v602
  %635 = vrot.lane.b32.xlu0 %v632, 64
  %v636 = vpop.permute.xlu0 %635
  %v638 = vmul.f32 %v632, %v636
  %640 = vrot.lane.b32.xlu0 %v638, 32
  %v641 = vpop.permute.xlu0 %640
  %v643 = vadd.f32 %v633, %v641
  %v644 = vtanh.pop %v643
  %646 = vrot.lane.b32.xlu0 %v644, 64
  %v647 = vpop.permute.xlu0 %646
  %v649 = vmul.f32 %v632, %v647
  %v650 = vpack.c.bf16 %v649, %v649
  %652 = vrot.lane.b32.xlu0 %v650, 32
  %v653 = vpop.permute.xlu0 %652
  %v655 = vsel %vm112, %v653, 0
  %657 = vmatpush.bf16.msra.mxu0 0
  %658 = vmatpush.bf16.msra.mxu0 0
  %659 = vmatpush.bf16.msra.mxu0 0
  %660 = vmatpush.bf16.msra.mxu0 0
  %661 = vmatpush.bf16.msra.mxu0 0
  %662 = vmatpush.bf16.msra.mxu0 0
  %663 = vmatpush.bf16.msra.mxu0 %v323
  %664 = vmatpush.bf16.msra.mxu0 %v322
  %665 = vmatmul.bf16.gmra.mxu0 %v655
  %v666 = vpop.f32.mrf.mxu0
  %v667 = vadd.f32 0.0, %v666
  %v668 = vpop.f32.mrf.mxu0
  %669 = vdwg.mxu0
  %v670 = vadd.f32 %v284, %v667
  %v671 = vtanh.pop %v670
  %v672 = vmul.f32 %v308, %v671
  %v673 = vadd.f32 %v672, %v309
  %v674 = vmul.f32 %v673, %v643
  %676 = vrot.lane.b32.xlu0 %v673, 64
  %v677 = vpop.permute.xlu0 %676
  %v679 = vmul.f32 %v673, %v677
  %681 = vrot.lane.b32.xlu0 %v679, 32
  %v682 = vpop.permute.xlu0 %681
  %v684 = vadd.f32 %v674, %v682
  %v685 = vtanh.pop %v684
  %687 = vrot.lane.b32.xlu0 %v685, 64
  %v688 = vpop.permute.xlu0 %687
  %v690 = vmul.f32 %v673, %v688
  %v691 = vpack.c.bf16 %v690, %v690
  %693 = vrot.lane.b32.xlu0 %v691, 32
  %v694 = vpop.permute.xlu0 %693
  %v696 = vsel %vm112, %v694, 0
  %698 = vmatpush.bf16.msra.mxu0 0
  %699 = vmatpush.bf16.msra.mxu0 0
  %700 = vmatpush.bf16.msra.mxu0 0
  %701 = vmatpush.bf16.msra.mxu0 0
  %702 = vmatpush.bf16.msra.mxu0 0
  %703 = vmatpush.bf16.msra.mxu0 0
  %704 = vmatpush.bf16.msra.mxu0 %v323
  %705 = vmatpush.bf16.msra.mxu0 %v322
  %706 = vmatmul.bf16.gmra.mxu0 %v696
  %v707 = vpop.f32.mrf.mxu0
  %v708 = vadd.f32 0.0, %v707
  %v709 = vpop.f32.mrf.mxu0
  %710 = vdwg.mxu0
  %v711 = vadd.f32 %v286, %v708
  %v712 = vtanh.pop %v711
  %v713 = vmul.f32 %v308, %v712
  %v714 = vadd.f32 %v713, %v309
  %v715 = vmul.f32 %v714, %v684
  %717 = vrot.lane.b32.xlu0 %v714, 64
  %v718 = vpop.permute.xlu0 %717
  %v720 = vmul.f32 %v714, %v718
  %722 = vrot.lane.b32.xlu0 %v720, 32
  %v723 = vpop.permute.xlu0 %722
  %v725 = vadd.f32 %v715, %v723
  %v726 = vtanh.pop %v725
  %728 = vrot.lane.b32.xlu0 %v726, 64
  %v729 = vpop.permute.xlu0 %728
  %v731 = vmul.f32 %v714, %v729
  %v732 = vpack.c.bf16 %v731, %v731
  %734 = vrot.lane.b32.xlu0 %v732, 32
  %v735 = vpop.permute.xlu0 %734
  %v737 = vsel %vm112, %v735, 0
  %739 = vmatpush.bf16.msra.mxu0 0
  %740 = vmatpush.bf16.msra.mxu0 0
  %741 = vmatpush.bf16.msra.mxu0 0
  %742 = vmatpush.bf16.msra.mxu0 0
  %743 = vmatpush.bf16.msra.mxu0 0
  %744 = vmatpush.bf16.msra.mxu0 0
  %745 = vmatpush.bf16.msra.mxu0 %v323
  %746 = vmatpush.bf16.msra.mxu0 %v322
  %747 = vmatmul.bf16.gmra.mxu0 %v737
  %v748 = vpop.f32.mrf.mxu0
  %v749 = vadd.f32 0.0, %v748
  %v750 = vpop.f32.mrf.mxu0
  %751 = vdwg.mxu0
  %v752 = vadd.f32 %v289, %v749
  %v753 = vtanh.pop %v752
  %v754 = vmul.f32 %v308, %v753
  %v755 = vadd.f32 %v754, %v309
  %v756 = vmul.f32 %v755, %v725
  %758 = vrot.lane.b32.xlu0 %v755, 64
  %v759 = vpop.permute.xlu0 %758
  %v761 = vmul.f32 %v755, %v759
  %763 = vrot.lane.b32.xlu0 %v761, 32
  %v764 = vpop.permute.xlu0 %763
  %v766 = vadd.f32 %v756, %v764
  %v767 = vtanh.pop %v766
  %769 = vrot.lane.b32.xlu0 %v767, 64
  %v770 = vpop.permute.xlu0 %769
  %v772 = vmul.f32 %v755, %v770
  %v773 = vpack.c.bf16 %v772, %v772
  %775 = vrot.lane.b32.xlu0 %v773, 32
  %v776 = vpop.permute.xlu0 %775
  %v778 = vsel %vm112, %v776, 0
  %780 = vmatpush.bf16.msra.mxu0 0
  %781 = vmatpush.bf16.msra.mxu0 0
  %782 = vmatpush.bf16.msra.mxu0 0
  %783 = vmatpush.bf16.msra.mxu0 0
  %784 = vmatpush.bf16.msra.mxu0 0
  %785 = vmatpush.bf16.msra.mxu0 0
  %786 = vmatpush.bf16.msra.mxu0 %v323
  %787 = vmatpush.bf16.msra.mxu0 %v322
  %788 = vmatmul.bf16.gmra.mxu0 %v778
  %v789 = vpop.f32.mrf.mxu0
  %v790 = vadd.f32 0.0, %v789
  %v791 = vpop.f32.mrf.mxu0
  %792 = vdwg.mxu0
  %v793 = vadd.f32 %v291, %v790
  %v794 = vtanh.pop %v793
  %v795 = vmul.f32 %v308, %v794
  %v796 = vadd.f32 %v795, %v309
  %v797 = vmul.f32 %v796, %v766
  %799 = vrot.lane.b32.xlu0 %v796, 64
  %v800 = vpop.permute.xlu0 %799
  %v802 = vmul.f32 %v796, %v800
  %804 = vrot.lane.b32.xlu0 %v802, 32
  %v805 = vpop.permute.xlu0 %804
  %v807 = vadd.f32 %v797, %v805
  %v808 = vtanh.pop %v807
  %810 = vrot.lane.b32.xlu0 %v808, 64
  %v811 = vpop.permute.xlu0 %810
  %v813 = vmul.f32 %v796, %v811
  %v814 = vpack.c.bf16 %v813, %v813
  %816 = vrot.lane.b32.xlu0 %v814, 32
  %v817 = vpop.permute.xlu0 %816
  %v819 = vsel %vm112, %v817, 0
  %821 = vmatpush.bf16.msra.mxu0 0
  %822 = vmatpush.bf16.msra.mxu0 0
  %823 = vmatpush.bf16.msra.mxu0 0
  %824 = vmatpush.bf16.msra.mxu0 0
  %825 = vmatpush.bf16.msra.mxu0 0
  %826 = vmatpush.bf16.msra.mxu0 0
  %827 = vmatpush.bf16.msra.mxu0 %v323
  %828 = vmatpush.bf16.msra.mxu0 %v322
  %829 = vmatmul.bf16.gmra.mxu0 %v819
  %v830 = vpop.f32.mrf.mxu0
  %v831 = vadd.f32 0.0, %v830
  %v832 = vpop.f32.mrf.mxu0
  %833 = vdwg.mxu0
  %v834 = vadd.f32 %v294, %v831
  %v835 = vtanh.pop %v834
  %v836 = vmul.f32 %v308, %v835
  %v837 = vadd.f32 %v836, %v309
  %v838 = vmul.f32 %v837, %v807
  %840 = vrot.lane.b32.xlu0 %v837, 64
  %v841 = vpop.permute.xlu0 %840
  %v843 = vmul.f32 %v837, %v841
  %845 = vrot.lane.b32.xlu0 %v843, 32
  %v846 = vpop.permute.xlu0 %845
  %v848 = vadd.f32 %v838, %v846
  %v849 = vtanh.pop %v848
  %851 = vrot.lane.b32.xlu0 %v849, 64
  %v852 = vpop.permute.xlu0 %851
  %v854 = vmul.f32 %v837, %v852
  %v855 = vpack.c.bf16 %v854, %v854
  %857 = vrot.lane.b32.xlu0 %v855, 32
  %v858 = vpop.permute.xlu0 %857
  %v860 = vsel %vm112, %v858, 0
  %862 = vmatpush.bf16.msra.mxu0 0
  %863 = vmatpush.bf16.msra.mxu0 0
  %864 = vmatpush.bf16.msra.mxu0 0
  %865 = vmatpush.bf16.msra.mxu0 0
  %866 = vmatpush.bf16.msra.mxu0 0
  %867 = vmatpush.bf16.msra.mxu0 0
  %868 = vmatpush.bf16.msra.mxu0 %v323
  %869 = vmatpush.bf16.msra.mxu0 %v322
  %870 = vmatmul.bf16.gmra.mxu0 %v860
  %v871 = vpop.f32.mrf.mxu0
  %v872 = vadd.f32 0.0, %v871
  %v873 = vpop.f32.mrf.mxu0
  %874 = vdwg.mxu0
  %v875 = vadd.f32 %v296, %v872
  %v876 = vtanh.pop %v875
  %v877 = vmul.f32 %v308, %v876
  %v878 = vadd.f32 %v877, %v309
  %v879 = vmul.f32 %v878, %v848
  %881 = vrot.lane.b32.xlu0 %v878, 64
  %v882 = vpop.permute.xlu0 %881
  %v884 = vmul.f32 %v878, %v882
  %886 = vrot.lane.b32.xlu0 %v884, 32
  %v887 = vpop.permute.xlu0 %886
  %v889 = vadd.f32 %v879, %v887
  %v890 = vtanh.pop %v889
  %892 = vrot.lane.b32.xlu0 %v890, 64
  %v893 = vpop.permute.xlu0 %892
  %v895 = vmul.f32 %v878, %v893
  %v896 = vpack.c.bf16 %v895, %v895
  %898 = vrot.lane.b32.xlu0 %v896, 32
  %v899 = vpop.permute.xlu0 %898
  %v901 = vsel %vm112, %v899, 0
  %903 = vmatpush.bf16.msra.mxu0 0
  %904 = vmatpush.bf16.msra.mxu0 0
  %905 = vmatpush.bf16.msra.mxu0 0
  %906 = vmatpush.bf16.msra.mxu0 0
  %907 = vmatpush.bf16.msra.mxu0 0
  %908 = vmatpush.bf16.msra.mxu0 0
  %909 = vmatpush.bf16.msra.mxu0 %v323
  %910 = vmatpush.bf16.msra.mxu0 %v322
  %911 = vmatmul.bf16.gmra.mxu0 %v901
  %v912 = vpop.f32.mrf.mxu0
  %v913 = vadd.f32 0.0, %v912
  %v914 = vpop.f32.mrf.mxu0
  %915 = vdwg.mxu0
  %v916 = vadd.f32 %v299, %v913
  %v917 = vtanh.pop %v916
  %v918 = vmul.f32 %v308, %v917
  %v919 = vadd.f32 %v918, %v309
  %v920 = vmul.f32 %v919, %v889
  %922 = vrot.lane.b32.xlu0 %v919, 64
  %v923 = vpop.permute.xlu0 %922
  %v925 = vmul.f32 %v919, %v923
  %927 = vrot.lane.b32.xlu0 %v925, 32
  %v928 = vpop.permute.xlu0 %927
  %v930 = vadd.f32 %v920, %v928
  %v931 = vtanh.pop %v930
  %933 = vrot.lane.b32.xlu0 %v931, 64
  %v934 = vpop.permute.xlu0 %933
  %v936 = vmul.f32 %v919, %v934
  %v937 = vpack.c.bf16 %v936, %v936
  %939 = vrot.lane.b32.xlu0 %v937, 32
  %v940 = vpop.permute.xlu0 %939
  %v942 = vsel %vm112, %v940, 0
  %944 = vmatpush.bf16.msra.mxu0 0
  %945 = vmatpush.bf16.msra.mxu0 0
  %946 = vmatpush.bf16.msra.mxu0 0
  %947 = vmatpush.bf16.msra.mxu0 0
  %948 = vmatpush.bf16.msra.mxu0 0
  %949 = vmatpush.bf16.msra.mxu0 0
  %950 = vmatpush.bf16.msra.mxu0 %v323
  %951 = vmatpush.bf16.msra.mxu0 %v322
  %952 = vmatmul.bf16.gmra.mxu0 %v942
  %v953 = vpop.f32.mrf.mxu0
  %v954 = vadd.f32 0.0, %v953
  %v955 = vpop.f32.mrf.mxu0
  %956 = vdwg.mxu0
  %v957 = vadd.f32 %v301, %v954
  %v958 = vtanh.pop %v957
  %v959 = vmul.f32 %v308, %v958
  %v960 = vadd.f32 %v959, %v309
  %v961 = vmul.f32 %v960, %v930
  %963 = vrot.lane.b32.xlu0 %v960, 64
  %v964 = vpop.permute.xlu0 %963
  %v966 = vmul.f32 %v960, %v964
  %968 = vrot.lane.b32.xlu0 %v966, 32
  %v969 = vpop.permute.xlu0 %968
  %v971 = vadd.f32 %v961, %v969
  %v972 = vtanh.pop %v971
  %974 = vrot.lane.b32.xlu0 %v972, 64
  %v975 = vpop.permute.xlu0 %974
  %v977 = vmul.f32 %v960, %v975
  %v978 = vpack.c.bf16 %v977, %v977
  %v979 = vld [vmem:[%s6] sm:$0xf]
  %v980 = vld [vmem:[%s6 + $0x4] sm:$0xf]
  %v981 = vld [vmem:[%s6 + $0x8] sm:$0xf]
  %v982 = vld [vmem:[%s6 + $0xc] sm:$0xf]
  %v983 = vld [vmem:[%s7] sm:$0x1]
  %v985 = vperm.slane %v983, 0
  %988 = vrot.lane.b32.xlu0 %v978, 32
  %v989 = vpop.permute.xlu0 %988
  %v994 = vunpack.c.l.b16 %v979
  %v995 = vunpack.c.l.b16 %v980
  %v996 = vunpack.c.l.b16 %v981
  %v997 = vunpack.c.l.b16 %v982
  %v998 = vpack.c.b16 %v995, %v994
  %v999 = vpack.c.b16 %v997, %v996
  %v1003 = vsel %vm112, %v989, 0
  %1005 = vmatpush.bf16.msra.mxu0 0
  %1006 = vmatpush.bf16.msra.mxu0 0
  %1007 = vmatpush.bf16.msra.mxu0 0
  %1008 = vmatpush.bf16.msra.mxu0 0
  %1009 = vmatpush.bf16.msra.mxu0 0
  %1010 = vmatpush.bf16.msra.mxu0 0
  %1011 = vmatpush.bf16.msra.mxu0 %v999
  %1012 = vmatpush.bf16.msra.mxu0 %v998
  %1013 = vmatmul.bf16.gmra.mxu0 %v1003
  %v1014 = vpop.f32.mrf.mxu0
  %v1015 = vadd.f32 %v985, %v1014
  %v1016 = vpop.f32.mrf.mxu0
  %1017 = vdwg.mxu0
  %v1018 = vmax.f32 %v1015, 0.0
  %v1019 = vpack.c.bf16 %v1018, %v1018
  %v1020 = vld [vmem:[%s8] sm:$0xf]
  %v1021 = vld [vmem:[%s8 + $0x4] sm:$0xf]
  %v1022 = vld [vmem:[%s8 + $0x8] sm:$0xf]
  %v1023 = vld [vmem:[%s8 + $0xc] sm:$0xf]
  %v1024 = vld [vmem:[%s8 + $0x10] sm:$0xf]
  %v1025 = vld [vmem:[%s8 + $0x14] sm:$0xf]
  %v1026 = vld [vmem:[%s8 + $0x18] sm:$0xf]
  %v1027 = vld [vmem:[%s8 + $0x1c] sm:$0xf]
  %v1028 = vld [vmem:[%s9] sm:$0x1]
  %v1030 = vperm.slane %v1028, 0
  %v1040 = vunpack.c.l.b16 %v1020
  %v1041 = vunpack.c.l.b16 %v1021
  %v1042 = vunpack.c.l.b16 %v1022
  %v1043 = vunpack.c.l.b16 %v1023
  %v1044 = vunpack.c.l.b16 %v1024
  %v1045 = vunpack.c.l.b16 %v1025
  %v1046 = vunpack.c.l.b16 %v1026
  %v1047 = vunpack.c.l.b16 %v1027
  %v1048 = vpack.c.b16 %v1041, %v1040
  %v1049 = vpack.c.b16 %v1043, %v1042
  %v1050 = vpack.c.b16 %v1045, %v1044
  %v1051 = vpack.c.b16 %v1047, %v1046
  %vm1056 = vcmask 523264
  %v1058 = vsel %vm1056, %v1019, 0
  %1060 = vmatpush.bf16.msra.mxu0 0
  %1061 = vmatpush.bf16.msra.mxu0 0
  %1062 = vmatpush.bf16.msra.mxu0 0
  %1063 = vmatpush.bf16.msra.mxu0 0
  %1064 = vmatpush.bf16.msra.mxu0 %v1051
  %1065 = vmatpush.bf16.msra.mxu0 %v1050
  %1066 = vmatpush.bf16.msra.mxu0 %v1049
  %1067 = vmatpush.bf16.msra.mxu0 %v1048
  %1068 = vmatmul.bf16.gmra.mxu0 %v1058
  %v1069 = vpop.f32.mrf.mxu0
  %v1070 = vadd.f32 %v1030, %v1069
  %v1071 = vpop.f32.mrf.mxu0
  %1072 = vdwg.mxu0
  %1073 = vst [vmem:[%s10] sm:$0xff] %v1070
  // Predicated region
  $region42: #{cnn_lstm_forward.1} parent=0 // pred_check
    _
  $region43: #{cnn_lstm_forward.1} parent=0 // pred_check_branch
    %1075 = sbr.rel (0) target = $region45
  $region44: #{cnn_lstm_forward.1} parent=0 // pred_region
    _
  $region45: #{cnn_lstm_forward.1} parent=0 // pred_fallthru
    _
  // Predicated region
  $region46: #{cnn_lstm_forward.1} parent=0 // pred_check
    _
  $region47: #{cnn_lstm_forward.1} parent=0 // pred_check_branch
    %1077 = sbr.rel (0) target = $region49
  $region48: #{cnn_lstm_forward.1} parent=0 // pred_region
    _
  $region49: #{cnn_lstm_forward.1} parent=0 // pred_fallthru
    _

</llo_original>
